<compile_context>
chip_gen: v6e
topology: v6e:2x2x1
jax: 0.10.0
libtpu: 0.0.40
codegen_flags: <defaults>
</compile_context>

<pallas_src>
import functools

import jax
import jax.numpy as jnp
from jax.experimental import pallas as pl
from jax.experimental.pallas import tpu as pltpu

_LANE = 128


def _round_up(x, m):
    return (x + m - 1) // m * m


def _pad_axis(a, axis, size):
    if a.shape[axis] == size:
        return a
    pad = [(0, 0)] * a.ndim
    pad[axis] = (0, size - a.shape[axis])
    return jnp.pad(a, pad)


def _lstm_classifier_kernel(x_ref, w_ih_ref, w_hh_ref, b_ref,
                            w_dec_ref, b_dec_ref, w_cls_ref, b_cls_ref,
                            enc_ref, dec_ref, c_out_ref,
                            maxact_ref, argmax_ref, logit_ref,
                            gx_scr, *, hidden_dim):
    T = x_ref.shape[0]
    Hp = w_hh_ref.shape[0]          # hidden dim padded to a full 128-lane vreg

    # Hoisted, batched input projection + bias: one (T,E)@(E,4*Hp) MXU matmul.
    gx_scr[...] = (jnp.dot(x_ref[...], w_ih_ref[...],
                           preferred_element_type=jnp.float32) + b_ref[...])

    w_hh = w_hh_ref[...]            # (Hp, 4*Hp) — loaded once, stays resident

    # init_hidden(): zeros for (h, c); padded lanes remain exactly zero.
    h0 = jnp.zeros((1, Hp), jnp.float32)
    c0 = jnp.zeros((1, Hp), jnp.float32)

    def step(t, carry):
        h, c = carry
        # Only the recurrent matmul sits on the serial chain.
        gates = gx_scr[pl.ds(t, 1), :] + jnp.dot(
            h, w_hh, preferred_element_type=jnp.float32)        # (1, 4*Hp)

        # nn.LSTM gate order [i, f, g, o]; each gate is its own 128-lane-
        # aligned block, so these slices are free (no XLU rotates) and every
        # nonlinearity is one full-vreg EUP pass.
        i_g = jax.nn.sigmoid(gates[:, 0 * Hp:1 * Hp])
        f_g = jax.nn.sigmoid(gates[:, 1 * Hp:2 * Hp])
        g_g = jnp.tanh(gates[:, 2 * Hp:3 * Hp])
        o_g = jax.nn.sigmoid(gates[:, 3 * Hp:4 * Hp])

        c_new = f_g * c + i_g * g_g
        h_new = o_g * jnp.tanh(c_new)

        # 128-lane dense (lane-unmasked) row store into the resident (T, Hp)
        # block; HBM writeback happens once for the whole slab.
        # TODO(synk): at realistic T / batched sequences, stage 8 rows and
        # store full (8, Hp) sublane blocks to relieve the vst slot.
        enc_ref[pl.ds(t, 1), :] = h_new
        return (h_new, c_new)

    # T=8 here, so unroll=True is a full unroll; at realistic T use unroll=8.
    h_f, c_f = jax.lax.fori_loop(0, T, step, (h0, c0), unroll=True)

    c_out_ref[...] = c_f            # final h is enc[T-1]; not duplicated

    # Batched LM decoder: one (T,Hp)@(Hp,Vp) MXU matmul, lane-dense output.
    dec_ref[...] = (jnp.dot(enc_ref[...], w_dec_ref[...],
                            preferred_element_type=jnp.float32)
                    + b_dec_ref[...])

    # Per-step max / argmax over the hidden dim while enc is still in VMEM
    # (XLU cross-lane reduces as post-loop filler). Padded lanes are masked.
    enc = enc_ref[...]                                            # (T, Hp)
    lane = jax.lax.broadcasted_iota(jnp.int32, (T, Hp), 1)
    valid = lane < hidden_dim
    masked = jnp.where(valid, enc, -jnp.inf)
    m = jnp.max(masked, axis=-1, keepdims=True)                   # (T, 1)
    maxact_ref[...] = m
    hit = masked == m
    argmax_ref[...] = jnp.min(jnp.where(hit, lane, Hp),
                              axis=-1, keepdims=True)             # first max

    # Classification head on the final hidden state (VPU mul + lane reduce).
    logit_ref[...] = (jnp.sum(h_f * w_cls_ref[...], axis=-1, keepdims=True)
                      + b_cls_ref[...])


def lstm_classifier_forward(token_ids, params):
    """Mirrors LSTMClassifier.forward(paragraphs): returns (y_logits, value_dict)."""
    emb_table = params["embedding"]                 # (V, E), frozen
    T = token_ids.shape[0]
    E = emb_table.shape[1]
    H = params["w_hh_t"].shape[0]
    V = params["w_dec_t"].shape[1]
    Hp = _round_up(H, _LANE)
    Vp = _round_up(V, _LANE)

    # Embedding lookup (glue; frozen encoder.weight in the reference).
    x = emb_table[token_ids].astype(jnp.float32)    # (T, E)

    # Repack / zero-pad weights so each gate lands on its own 128-lane block
    # and every kernel output is 128-lane dense. Padding is numerically exact.
    w_ih_p = _pad_axis(params["w_ih_t"].reshape(E, 4, H), 2, Hp).reshape(E, 4 * Hp)
    w_hh_p = _pad_axis(
        _pad_axis(params["w_hh_t"].reshape(H, 4, H), 2, Hp).reshape(H, 4 * Hp),
        0, Hp)
    b_p = _pad_axis(params["b"].reshape(1, 4, H), 2, Hp).reshape(1, 4 * Hp)
    w_dec_p = _pad_axis(_pad_axis(params["w_dec_t"], 0, Hp), 1, Vp)
    b_dec_p = _pad_axis(params["b_dec"], 1, Vp)
    w_cls_p = _pad_axis(params["w_cls_t"].reshape(1, H), 1, Hp)
    b_cls = params["b_cls"]                          # (1, 1)

    out_shapes = (
        jax.ShapeDtypeStruct((T, Hp), jnp.float32),   # encoded_outputs (padded)
        jax.ShapeDtypeStruct((T, Vp), jnp.float32),   # decoded_outputs (padded)
        jax.ShapeDtypeStruct((1, Hp), jnp.float32),   # final c
        jax.ShapeDtypeStruct((T, 1), jnp.float32),    # max_activations
        jax.ShapeDtypeStruct((T, 1), jnp.int32),      # max_activation_index
        jax.ShapeDtypeStruct((1, 1), jnp.float32),    # classifier logit
    )

    grid_spec = pltpu.PrefetchScalarGridSpec(
        num_scalar_prefetch=0,
        grid=(1,),                                    # recurrence runs in-kernel
        in_specs=[
            pl.BlockSpec((T, E), lambda i: (0, 0)),          # embedded inputs
            pl.BlockSpec((E, 4 * Hp), lambda i: (0, 0)),     # W_ih^T (gate-aligned)
            pl.BlockSpec((Hp, 4 * Hp), lambda i: (0, 0)),    # W_hh^T (gate-aligned)
            pl.BlockSpec((1, 4 * Hp), lambda i: (0, 0)),     # bias (b_ih + b_hh)
            pl.BlockSpec((Hp, Vp), lambda i: (0, 0)),        # decoder W^T
            pl.BlockSpec((1, Vp), lambda i: (0, 0)),         # decoder b
            pl.BlockSpec((1, Hp), lambda i: (0, 0)),         # classifier w (row)
            pl.BlockSpec((1, 1), lambda i: (0, 0)),          # classifier b
        ],
        out_specs=[
            pl.BlockSpec((T, Hp), lambda i: (0, 0)),
            pl.BlockSpec((T, Vp), lambda i: (0, 0)),
            pl.BlockSpec((1, Hp), lambda i: (0, 0)),
            pl.BlockSpec((T, 1), lambda i: (0, 0)),
            pl.BlockSpec((T, 1), lambda i: (0, 0)),
            pl.BlockSpec((1, 1), lambda i: (0, 0)),
        ],
        scratch_shapes=[pltpu.VMEM((T, 4 * Hp), jnp.float32)],  # hoisted gates_x
    )

    # Advisory cost so XLA schedules the gather / reshapes around the call.
    cost = pl.CostEstimate(
        flops=2 * T * E * 4 * H + 2 * T * H * 4 * H + 2 * T * H * V + 2 * H,
        transcendentals=T * 5 * H,
        bytes_accessed=4 * (T * E + E * 4 * Hp + Hp * 4 * Hp + 4 * Hp
                            + Hp * Vp + Vp + Hp + 1
                            + T * Hp + T * Vp + Hp + 2 * T + 1),
    )

    enc_p, dec_p, c_p, maxact, amax, logit = pl.pallas_call(
        functools.partial(_lstm_classifier_kernel, hidden_dim=H),
        out_shape=out_shapes,
        grid_spec=grid_spec,
        compiler_params=pltpu.CompilerParams(
            dimension_semantics=("arbitrary",)),
        cost_estimate=cost,
    )(x, w_ih_p, w_hh_p, b_p, w_dec_p, b_dec_p, w_cls_p, b_cls)

    # Strip lane padding (cheap slices of lane-dense slabs).
    enc = enc_p[:, :H]                       # (T, H)
    dec = dec_p[:, :V]                       # (T, V)
    h_f = enc_p[T - 1:T, :H]                 # final hidden == last encoder row
    c_f = c_p[:, :H]

    # Precision note: MXU f32 matmuls use default (reduced) precision; the
    # looser 1e-2 tolerance vs. an exact f32 reference is accepted explicitly.
    y_logits = logit.reshape(1)

    # TODO(synk): activations_to_prune (in-place zeroing of selected hidden
    # units before the classifier head) is not implemented; this reproduces
    # the prunned_activations=None branch of the reference.

    value_dict = {
        "inputs": token_ids.reshape(T, 1),            # paragraphs.resize_((T, 1))
        "activations": enc.reshape(T, 1, H),          # encoded_outputs (detached)
        "decoded_outputs": dec,                       # LM logits per step
        "max_activations": maxact.reshape(T),
        "max_activation_index": amax.reshape(T),
        "hidden": (h_f.reshape(1, 1, H), c_f.reshape(1, 1, H)),
    }
    return y_logits, value_dict


def _reference_forward(token_ids, params):
    """Pure-JAX reference (same math) for a correctness sanity check."""
    x = params["embedding"][token_ids].astype(jnp.float32)
    H = params["w_hh_t"].shape[0]

    def step(carry, xt):
        h, c = carry
        gates = xt @ params["w_ih_t"] + h @ params["w_hh_t"] + params["b"][0]
        i = jax.nn.sigmoid(gates[0 * H:1 * H])
        f = jax.nn.sigmoid(gates[1 * H:2 * H])
        g = jnp.tanh(gates[2 * H:3 * H])
        o = jax.nn.sigmoid(gates[3 * H:4 * H])
        c = f * c + i * g
        h = o * jnp.tanh(c)
        return (h, c), h

    (h_f, c_f), hs = jax.lax.scan(step, (jnp.zeros(H), jnp.zeros(H)), x)
    dec = hs @ params["w_dec_t"] + params["b_dec"][0]
    logit = h_f @ params["w_cls_t"][:, 0] + params["b_cls"][0, 0]
    return hs, dec, h_f, jnp.reshape(logit, (1,))


def _init_params(key, vocab_size, embedding_dim, hidden_dim):
    ks = jax.random.split(key, 8)
    s_h = 1.0 / jnp.sqrt(hidden_dim)
    u = lambda k, shape, s: jax.random.uniform(k, shape, jnp.float32, -s, s)
    return {
        "embedding": u(ks[0], (vocab_size, embedding_dim), 1.0),
        "w_ih_t": u(ks[1], (embedding_dim, 4 * hidden_dim), s_h),
        "w_hh_t": u(ks[2], (hidden_dim, 4 * hidden_dim), s_h),
        "b": u(ks[3], (1, 4 * hidden_dim), s_h),          # b_ih + b_hh folded
        "w_dec_t": u(ks[4], (hidden_dim, vocab_size), s_h),
        "b_dec": u(ks[5], (1, vocab_size), s_h),
        "w_cls_t": u(ks[6], (hidden_dim, 1), s_h),
        "b_cls": u(ks[7], (1, 1), s_h),
    }


if __name__ == "__main__":
    T = 8           # paragraph length (seq)
    E = 32          # embedding_dim
    H = 32          # hidden_dim (padded to 128 lanes per gate inside the kernel)
    V = 64          # vocab_size (padded to 128 lanes inside the kernel)

    key = jax.random.PRNGKey(0)
    k_param, k_tok = jax.random.split(key)
    params = _init_params(k_param, V, E, H)
    token_ids = jax.random.randint(k_tok, (T,), 0, V, dtype=jnp.int32)

    y_logits, value_dict = jax.jit(lstm_classifier_forward)(token_ids, params)
    jax.block_until_ready(y_logits)

    # sanity-check against a pure-JAX reference
    enc_ref, dec_ref, h_ref, logit_ref = _reference_forward(token_ids, params)
    assert jnp.allclose(value_dict["activations"].reshape(T, H), enc_ref,
                        atol=1e-2, rtol=1e-2)
    assert jnp.allclose(value_dict["decoded_outputs"], dec_ref,
                        atol=1e-2, rtol=1e-2)
    assert jnp.allclose(value_dict["hidden"][0].reshape(H), h_ref,
                        atol=1e-2, rtol=1e-2)
    assert jnp.allclose(y_logits, logit_ref, atol=1e-2, rtol=1e-2)
    assert jnp.allclose(value_dict["max_activations"],
                        enc_ref.max(axis=-1), atol=1e-2, rtol=1e-2)
    assert jnp.array_equal(value_dict["max_activation_index"],
                           jnp.argmax(enc_ref, axis=-1).astype(jnp.int32))

    print("KERNEL_OK")
</pallas_src>

<mosaic_0001>
module attributes {stable_mosaic.version = 11 : i64} {
  func.func @_lstm_classifier_kernel(%arg0: i32, %arg1: memref<8x32xf32, #tpu.memory_space<vmem>>, %arg2: memref<32x512xf32, #tpu.memory_space<vmem>>, %arg3: memref<128x512xf32, #tpu.memory_space<vmem>>, %arg4: memref<1x512xf32, #tpu.memory_space<vmem>>, %arg5: memref<128x128xf32, #tpu.memory_space<vmem>>, %arg6: memref<1x128xf32, #tpu.memory_space<vmem>>, %arg7: memref<1x128xf32, #tpu.memory_space<vmem>>, %arg8: memref<1x1xf32, #tpu.memory_space<vmem>>, %arg9: memref<8x128xf32, #tpu.memory_space<vmem>>, %arg10: memref<8x128xf32, #tpu.memory_space<vmem>>, %arg11: memref<1x128xf32, #tpu.memory_space<vmem>>, %arg12: memref<8x1xf32, #tpu.memory_space<vmem>>, %arg13: memref<8x1xi32, #tpu.memory_space<vmem>>, %arg14: memref<1x1xf32, #tpu.memory_space<vmem>>, %arg15: memref<8x512xf32, #tpu.memory_space<vmem>>) attributes {dimension_semantics = [#tpu.dimension_semantics<arbitrary>], iteration_bounds = array<i64: 1>, scalar_prefetch = 0 : i64, scratch_operands = 1 : i64, tpu.core_type = #tpu.core_type<tc>, window_params = [{pipeline_mode = #tpu.pipeline_mode<synchronous>, transform_indices = @transform_0, window_bounds = array<i64: 8, 32>}, {pipeline_mode = #tpu.pipeline_mode<synchronous>, transform_indices = @transform_1, window_bounds = array<i64: 32, 512>}, {pipeline_mode = #tpu.pipeline_mode<synchronous>, transform_indices = @transform_2, window_bounds = array<i64: 128, 512>}, {pipeline_mode = #tpu.pipeline_mode<synchronous>, transform_indices = @transform_3, window_bounds = array<i64: 1, 512>}, {pipeline_mode = #tpu.pipeline_mode<synchronous>, transform_indices = @transform_4, window_bounds = array<i64: 128, 128>}, {pipeline_mode = #tpu.pipeline_mode<synchronous>, transform_indices = @transform_5, window_bounds = array<i64: 1, 128>}, {pipeline_mode = #tpu.pipeline_mode<synchronous>, transform_indices = @transform_6, window_bounds = array<i64: 1, 128>}, {pipeline_mode = #tpu.pipeline_mode<synchronous>, transform_indices = @transform_7, window_bounds = array<i64: 1, 1>}, {pipeline_mode = #tpu.pipeline_mode<synchronous>, transform_indices = @transform_8, window_bounds = array<i64: 8, 128>}, {pipeline_mode = #tpu.pipeline_mode<synchronous>, transform_indices = @transform_9, window_bounds = array<i64: 8, 128>}, {pipeline_mode = #tpu.pipeline_mode<synchronous>, transform_indices = @transform_10, window_bounds = array<i64: 1, 128>}, {pipeline_mode = #tpu.pipeline_mode<synchronous>, transform_indices = @transform_11, window_bounds = array<i64: 8, 1>}, {pipeline_mode = #tpu.pipeline_mode<synchronous>, transform_indices = @transform_12, window_bounds = array<i64: 8, 1>}, {pipeline_mode = #tpu.pipeline_mode<synchronous>, transform_indices = @transform_13, window_bounds = array<i64: 1, 1>}]} {
    %c0 = arith.constant 0 : index
    %c0_0 = arith.constant 0 : index
    %0 = vector.load %arg1[%c0, %c0_0] : memref<8x32xf32, #tpu.memory_space<vmem>>, vector<8x32xf32>
    %c0_1 = arith.constant 0 : index
    %c0_2 = arith.constant 0 : index
    %1 = vector.load %arg2[%c0_1, %c0_2] : memref<32x512xf32, #tpu.memory_space<vmem>>, vector<32x512xf32>
    %cst = arith.constant dense<0.000000e+00> : vector<8x512xf32>
    %2 = tpu.matmul %0, %1, %cst {dimension_numbers = #tpu.dot_dimension_numbers<[1], [0], [0], [1], [0, 0, 1, 1], [], []>} : vector<8x32xf32>, vector<32x512xf32>, vector<8x512xf32> -> vector<8x512xf32>
    %c0_3 = arith.constant 0 : index
    %c0_4 = arith.constant 0 : index
    %3 = vector.load %arg4[%c0_3, %c0_4] : memref<1x512xf32, #tpu.memory_space<vmem>>, vector<1x512xf32>
    %4 = vector.broadcast %3 : vector<1x512xf32> to vector<8x512xf32>
    %5 = arith.addf %2, %4 : vector<8x512xf32>
    %c0_5 = arith.constant 0 : index
    %c0_6 = arith.constant 0 : index
    %6 = vector.load %arg15[%c0_5, %c0_6] : memref<8x512xf32, #tpu.memory_space<vmem>>, vector<8x512xf32>
    tpu.vector_store %arg15[%c0_5, %c0_6], %5 {strides = array<i32>} : memref<8x512xf32, #tpu.memory_space<vmem>>, vector<8x512xf32>,
    %c0_7 = arith.constant 0 : index
    %c0_8 = arith.constant 0 : index
    %7 = vector.load %arg3[%c0_7, %c0_8] : memref<128x512xf32, #tpu.memory_space<vmem>>, vector<128x512xf32>
    %cst_9 = arith.constant 0.000000e+00 : f32
    %8 = vector.broadcast %cst_9 : f32 to vector<1x128xf32>
    %cst_10 = arith.constant 0.000000e+00 : f32
    %9 = vector.broadcast %cst_10 : f32 to vector<1x128xf32>
    %c0_i32 = arith.constant 0 : i32
    %10 = arith.index_cast %c0_i32 : i32 to index
    %c0_11 = arith.constant 0 : index
    %11 = vector.load %arg15[%10, %c0_11] : memref<8x512xf32, #tpu.memory_space<vmem>>, vector<1x512xf32>
    %cst_12 = arith.constant dense<0.000000e+00> : vector<1x512xf32>
    %12 = tpu.matmul %8, %7, %cst_12 {dimension_numbers = #tpu.dot_dimension_numbers<[1], [0], [0], [1], [0, 0, 1, 1], [], []>} : vector<1x128xf32>, vector<128x512xf32>, vector<1x512xf32> -> vector<1x512xf32>
    %13 = arith.addf %11, %12 : vector<1x512xf32>
    %14 = vector.extract_strided_slice %13 {offsets = [0, 0], sizes = [1, 128], strides = [1, 1]} : vector<1x512xf32> to vector<1x128xf32>
    %15 = arith.negf %14 : vector<1x128xf32>
    %16 = math.exp %15 : vector<1x128xf32>
    %cst_13 = arith.constant 1.000000e+00 : f32
    %17 = vector.broadcast %cst_13 : f32 to vector<1x128xf32>
    %18 = arith.addf %17, %16 : vector<1x128xf32>
    %19 = arith.divf %17, %18 : vector<1x128xf32>
    %20 = vector.extract_strided_slice %13 {offsets = [0, 128], sizes = [1, 128], strides = [1, 1]} : vector<1x512xf32> to vector<1x128xf32>
    %21 = arith.negf %20 : vector<1x128xf32>
    %22 = math.exp %21 : vector<1x128xf32>
    %cst_14 = arith.constant 1.000000e+00 : f32
    %23 = vector.broadcast %cst_14 : f32 to vector<1x128xf32>
    %24 = arith.addf %23, %22 : vector<1x128xf32>
    %25 = arith.divf %23, %24 : vector<1x128xf32>
    %26 = vector.extract_strided_slice %13 {offsets = [0, 256], sizes = [1, 128], strides = [1, 1]} : vector<1x512xf32> to vector<1x128xf32>
    %27 = math.tanh %26 : vector<1x128xf32>
    %28 = vector.extract_strided_slice %13 {offsets = [0, 384], sizes = [1, 128], strides = [1, 1]} : vector<1x512xf32> to vector<1x128xf32>
    %29 = arith.negf %28 : vector<1x128xf32>
    %30 = math.exp %29 : vector<1x128xf32>
    %cst_15 = arith.constant 1.000000e+00 : f32
    %31 = vector.broadcast %cst_15 : f32 to vector<1x128xf32>
    %32 = arith.addf %31, %30 : vector<1x128xf32>
    %33 = arith.divf %31, %32 : vector<1x128xf32>
    %34 = arith.mulf %25, %9 : vector<1x128xf32>
    %35 = arith.mulf %19, %27 : vector<1x128xf32>
    %36 = arith.addf %34, %35 : vector<1x128xf32>
    %37 = math.tanh %36 : vector<1x128xf32>
    %38 = arith.mulf %33, %37 : vector<1x128xf32>
    %39 = arith.index_cast %c0_i32 : i32 to index
    %c0_16 = arith.constant 0 : index
    %40 = vector.load %arg9[%39, %c0_16] : memref<8x128xf32, #tpu.memory_space<vmem>>, vector<1x128xf32>
    tpu.vector_store %arg9[%39, %c0_16], %38 {strides = array<i32>} : memref<8x128xf32, #tpu.memory_space<vmem>>, vector<1x128xf32>,
    %c1_i32 = arith.constant 1 : i32
    %41 = arith.index_cast %c1_i32 : i32 to index
    %c0_17 = arith.constant 0 : index
    %42 = vector.load %arg15[%41, %c0_17] : memref<8x512xf32, #tpu.memory_space<vmem>>, vector<1x512xf32>
    %cst_18 = arith.constant dense<0.000000e+00> : vector<1x512xf32>
    %43 = tpu.matmul %38, %7, %cst_18 {dimension_numbers = #tpu.dot_dimension_numbers<[1], [0], [0], [1], [0, 0, 1, 1], [], []>} : vector<1x128xf32>, vector<128x512xf32>, vector<1x512xf32> -> vector<1x512xf32>
    %44 = arith.addf %42, %43 : vector<1x512xf32>
    %45 = vector.extract_strided_slice %44 {offsets = [0, 0], sizes = [1, 128], strides = [1, 1]} : vector<1x512xf32> to vector<1x128xf32>
    %46 = arith.negf %45 : vector<1x128xf32>
    %47 = math.exp %46 : vector<1x128xf32>
    %cst_19 = arith.constant 1.000000e+00 : f32
    %48 = vector.broadcast %cst_19 : f32 to vector<1x128xf32>
    %49 = arith.addf %48, %47 : vector<1x128xf32>
    %50 = arith.divf %48, %49 : vector<1x128xf32>
    %51 = vector.extract_strided_slice %44 {offsets = [0, 128], sizes = [1, 128], strides = [1, 1]} : vector<1x512xf32> to vector<1x128xf32>
    %52 = arith.negf %51 : vector<1x128xf32>
    %53 = math.exp %52 : vector<1x128xf32>
    %cst_20 = arith.constant 1.000000e+00 : f32
    %54 = vector.broadcast %cst_20 : f32 to vector<1x128xf32>
    %55 = arith.addf %54, %53 : vector<1x128xf32>
    %56 = arith.divf %54, %55 : vector<1x128xf32>
    %57 = vector.extract_strided_slice %44 {offsets = [0, 256], sizes = [1, 128], strides = [1, 1]} : vector<1x512xf32> to vector<1x128xf32>
    %58 = math.tanh %57 : vector<1x128xf32>
    %59 = vector.extract_strided_slice %44 {offsets = [0, 384], sizes = [1, 128], strides = [1, 1]} : vector<1x512xf32> to vector<1x128xf32>
    %60 = arith.negf %59 : vector<1x128xf32>
    %61 = math.exp %60 : vector<1x128xf32>
    %cst_21 = arith.constant 1.000000e+00 : f32
    %62 = vector.broadcast %cst_21 : f32 to vector<1x128xf32>
    %63 = arith.addf %62, %61 : vector<1x128xf32>
    %64 = arith.divf %62, %63 : vector<1x128xf32>
    %65 = arith.mulf %56, %36 : vector<1x128xf32>
    %66 = arith.mulf %50, %58 : vector<1x128xf32>
    %67 = arith.addf %65, %66 : vector<1x128xf32>
    %68 = math.tanh %67 : vector<1x128xf32>
    %69 = arith.mulf %64, %68 : vector<1x128xf32>
    %70 = arith.index_cast %c1_i32 : i32 to index
    %c0_22 = arith.constant 0 : index
    %71 = vector.load %arg9[%70, %c0_22] : memref<8x128xf32, #tpu.memory_space<vmem>>, vector<1x128xf32>
    tpu.vector_store %arg9[%70, %c0_22], %69 {strides = array<i32>} : memref<8x128xf32, #tpu.memory_space<vmem>>, vector<1x128xf32>,
    %c2_i32 = arith.constant 2 : i32
    %72 = arith.index_cast %c2_i32 : i32 to index
    %c0_23 = arith.constant 0 : index
    %73 = vector.load %arg15[%72, %c0_23] : memref<8x512xf32, #tpu.memory_space<vmem>>, vector<1x512xf32>
    %cst_24 = arith.constant dense<0.000000e+00> : vector<1x512xf32>
    %74 = tpu.matmul %69, %7, %cst_24 {dimension_numbers = #tpu.dot_dimension_numbers<[1], [0], [0], [1], [0, 0, 1, 1], [], []>} : vector<1x128xf32>, vector<128x512xf32>, vector<1x512xf32> -> vector<1x512xf32>
    %75 = arith.addf %73, %74 : vector<1x512xf32>
    %76 = vector.extract_strided_slice %75 {offsets = [0, 0], sizes = [1, 128], strides = [1, 1]} : vector<1x512xf32> to vector<1x128xf32>
    %77 = arith.negf %76 : vector<1x128xf32>
    %78 = math.exp %77 : vector<1x128xf32>
    %cst_25 = arith.constant 1.000000e+00 : f32
    %79 = vector.broadcast %cst_25 : f32 to vector<1x128xf32>
    %80 = arith.addf %79, %78 : vector<1x128xf32>
    %81 = arith.divf %79, %80 : vector<1x128xf32>
    %82 = vector.extract_strided_slice %75 {offsets = [0, 128], sizes = [1, 128], strides = [1, 1]} : vector<1x512xf32> to vector<1x128xf32>
    %83 = arith.negf %82 : vector<1x128xf32>
    %84 = math.exp %83 : vector<1x128xf32>
    %cst_26 = arith.constant 1.000000e+00 : f32
    %85 = vector.broadcast %cst_26 : f32 to vector<1x128xf32>
    %86 = arith.addf %85, %84 : vector<1x128xf32>
    %87 = arith.divf %85, %86 : vector<1x128xf32>
    %88 = vector.extract_strided_slice %75 {offsets = [0, 256], sizes = [1, 128], strides = [1, 1]} : vector<1x512xf32> to vector<1x128xf32>
    %89 = math.tanh %88 : vector<1x128xf32>
    %90 = vector.extract_strided_slice %75 {offsets = [0, 384], sizes = [1, 128], strides = [1, 1]} : vector<1x512xf32> to vector<1x128xf32>
    %91 = arith.negf %90 : vector<1x128xf32>
    %92 = math.exp %91 : vector<1x128xf32>
    %cst_27 = arith.constant 1.000000e+00 : f32
    %93 = vector.broadcast %cst_27 : f32 to vector<1x128xf32>
    %94 = arith.addf %93, %92 : vector<1x128xf32>
    %95 = arith.divf %93, %94 : vector<1x128xf32>
    %96 = arith.mulf %87, %67 : vector<1x128xf32>
    %97 = arith.mulf %81, %89 : vector<1x128xf32>
    %98 = arith.addf %96, %97 : vector<1x128xf32>
    %99 = math.tanh %98 : vector<1x128xf32>
    %100 = arith.mulf %95, %99 : vector<1x128xf32>
    %101 = arith.index_cast %c2_i32 : i32 to index
    %c0_28 = arith.constant 0 : index
    %102 = vector.load %arg9[%101, %c0_28] : memref<8x128xf32, #tpu.memory_space<vmem>>, vector<1x128xf32>
    tpu.vector_store %arg9[%101, %c0_28], %100 {strides = array<i32>} : memref<8x128xf32, #tpu.memory_space<vmem>>, vector<1x128xf32>,
    %c3_i32 = arith.constant 3 : i32
    %103 = arith.index_cast %c3_i32 : i32 to index
    %c0_29 = arith.constant 0 : index
    %104 = vector.load %arg15[%103, %c0_29] : memref<8x512xf32, #tpu.memory_space<vmem>>, vector<1x512xf32>
    %cst_30 = arith.constant dense<0.000000e+00> : vector<1x512xf32>
    %105 = tpu.matmul %100, %7, %cst_30 {dimension_numbers = #tpu.dot_dimension_numbers<[1], [0], [0], [1], [0, 0, 1, 1], [], []>} : vector<1x128xf32>, vector<128x512xf32>, vector<1x512xf32> -> vector<1x512xf32>
    %106 = arith.addf %104, %105 : vector<1x512xf32>
    %107 = vector.extract_strided_slice %106 {offsets = [0, 0], sizes = [1, 128], strides = [1, 1]} : vector<1x512xf32> to vector<1x128xf32>
    %108 = arith.negf %107 : vector<1x128xf32>
    %109 = math.exp %108 : vector<1x128xf32>
    %cst_31 = arith.constant 1.000000e+00 : f32
    %110 = vector.broadcast %cst_31 : f32 to vector<1x128xf32>
    %111 = arith.addf %110, %109 : vector<1x128xf32>
    %112 = arith.divf %110, %111 : vector<1x128xf32>
    %113 = vector.extract_strided_slice %106 {offsets = [0, 128], sizes = [1, 128], strides = [1, 1]} : vector<1x512xf32> to vector<1x128xf32>
    %114 = arith.negf %113 : vector<1x128xf32>
    %115 = math.exp %114 : vector<1x128xf32>
    %cst_32 = arith.constant 1.000000e+00 : f32
    %116 = vector.broadcast %cst_32 : f32 to vector<1x128xf32>
    %117 = arith.addf %116, %115 : vector<1x128xf32>
    %118 = arith.divf %116, %117 : vector<1x128xf32>
    %119 = vector.extract_strided_slice %106 {offsets = [0, 256], sizes = [1, 128], strides = [1, 1]} : vector<1x512xf32> to vector<1x128xf32>
    %120 = math.tanh %119 : vector<1x128xf32>
    %121 = vector.extract_strided_slice %106 {offsets = [0, 384], sizes = [1, 128], strides = [1, 1]} : vector<1x512xf32> to vector<1x128xf32>
    %122 = arith.negf %121 : vector<1x128xf32>
    %123 = math.exp %122 : vector<1x128xf32>
    %cst_33 = arith.constant 1.000000e+00 : f32
    %124 = vector.broadcast %cst_33 : f32 to vector<1x128xf32>
    %125 = arith.addf %124, %123 : vector<1x128xf32>
    %126 = arith.divf %124, %125 : vector<1x128xf32>
    %127 = arith.mulf %118, %98 : vector<1x128xf32>
    %128 = arith.mulf %112, %120 : vector<1x128xf32>
    %129 = arith.addf %127, %128 : vector<1x128xf32>
    %130 = math.tanh %129 : vector<1x128xf32>
    %131 = arith.mulf %126, %130 : vector<1x128xf32>
    %132 = arith.index_cast %c3_i32 : i32 to index
    %c0_34 = arith.constant 0 : index
    %133 = vector.load %arg9[%132, %c0_34] : memref<8x128xf32, #tpu.memory_space<vmem>>, vector<1x128xf32>
    tpu.vector_store %arg9[%132, %c0_34], %131 {strides = array<i32>} : memref<8x128xf32, #tpu.memory_space<vmem>>, vector<1x128xf32>,
    %c4_i32 = arith.constant 4 : i32
    %134 = arith.index_cast %c4_i32 : i32 to index
    %c0_35 = arith.constant 0 : index
    %135 = vector.load %arg15[%134, %c0_35] : memref<8x512xf32, #tpu.memory_space<vmem>>, vector<1x512xf32>
    %cst_36 = arith.constant dense<0.000000e+00> : vector<1x512xf32>
    %136 = tpu.matmul %131, %7, %cst_36 {dimension_numbers = #tpu.dot_dimension_numbers<[1], [0], [0], [1], [0, 0, 1, 1], [], []>} : vector<1x128xf32>, vector<128x512xf32>, vector<1x512xf32> -> vector<1x512xf32>
    %137 = arith.addf %135, %136 : vector<1x512xf32>
    %138 = vector.extract_strided_slice %137 {offsets = [0, 0], sizes = [1, 128], strides = [1, 1]} : vector<1x512xf32> to vector<1x128xf32>
    %139 = arith.negf %138 : vector<1x128xf32>
    %140 = math.exp %139 : vector<1x128xf32>
    %cst_37 = arith.constant 1.000000e+00 : f32
    %141 = vector.broadcast %cst_37 : f32 to vector<1x128xf32>
    %142 = arith.addf %141, %140 : vector<1x128xf32>
    %143 = arith.divf %141, %142 : vector<1x128xf32>
    %144 = vector.extract_strided_slice %137 {offsets = [0, 128], sizes = [1, 128], strides = [1, 1]} : vector<1x512xf32> to vector<1x128xf32>
    %145 = arith.negf %144 : vector<1x128xf32>
    %146 = math.exp %145 : vector<1x128xf32>
    %cst_38 = arith.constant 1.000000e+00 : f32
    %147 = vector.broadcast %cst_38 : f32 to vector<1x128xf32>
    %148 = arith.addf %147, %146 : vector<1x128xf32>
    %149 = arith.divf %147, %148 : vector<1x128xf32>
    %150 = vector.extract_strided_slice %137 {offsets = [0, 256], sizes = [1, 128], strides = [1, 1]} : vector<1x512xf32> to vector<1x128xf32>
    %151 = math.tanh %150 : vector<1x128xf32>
    %152 = vector.extract_strided_slice %137 {offsets = [0, 384], sizes = [1, 128], strides = [1, 1]} : vector<1x512xf32> to vector<1x128xf32>
    %153 = arith.negf %152 : vector<1x128xf32>
    %154 = math.exp %153 : vector<1x128xf32>
    %cst_39 = arith.constant 1.000000e+00 : f32
    %155 = vector.broadcast %cst_39 : f32 to vector<1x128xf32>
    %156 = arith.addf %155, %154 : vector<1x128xf32>
    %157 = arith.divf %155, %156 : vector<1x128xf32>
    %158 = arith.mulf %149, %129 : vector<1x128xf32>
    %159 = arith.mulf %143, %151 : vector<1x128xf32>
    %160 = arith.addf %158, %159 : vector<1x128xf32>
    %161 = math.tanh %160 : vector<1x128xf32>
    %162 = arith.mulf %157, %161 : vector<1x128xf32>
    %163 = arith.index_cast %c4_i32 : i32 to index
    %c0_40 = arith.constant 0 : index
    %164 = vector.load %arg9[%163, %c0_40] : memref<8x128xf32, #tpu.memory_space<vmem>>, vector<1x128xf32>
    tpu.vector_store %arg9[%163, %c0_40], %162 {strides = array<i32>} : memref<8x128xf32, #tpu.memory_space<vmem>>, vector<1x128xf32>,
    %c5_i32 = arith.constant 5 : i32
    %165 = arith.index_cast %c5_i32 : i32 to index
    %c0_41 = arith.constant 0 : index
    %166 = vector.load %arg15[%165, %c0_41] : memref<8x512xf32, #tpu.memory_space<vmem>>, vector<1x512xf32>
    %cst_42 = arith.constant dense<0.000000e+00> : vector<1x512xf32>
    %167 = tpu.matmul %162, %7, %cst_42 {dimension_numbers = #tpu.dot_dimension_numbers<[1], [0], [0], [1], [0, 0, 1, 1], [], []>} : vector<1x128xf32>, vector<128x512xf32>, vector<1x512xf32> -> vector<1x512xf32>
    %168 = arith.addf %166, %167 : vector<1x512xf32>
    %169 = vector.extract_strided_slice %168 {offsets = [0, 0], sizes = [1, 128], strides = [1, 1]} : vector<1x512xf32> to vector<1x128xf32>
    %170 = arith.negf %169 : vector<1x128xf32>
    %171 = math.exp %170 : vector<1x128xf32>
    %cst_43 = arith.constant 1.000000e+00 : f32
    %172 = vector.broadcast %cst_43 : f32 to vector<1x128xf32>
    %173 = arith.addf %172, %171 : vector<1x128xf32>
    %174 = arith.divf %172, %173 : vector<1x128xf32>
    %175 = vector.extract_strided_slice %168 {offsets = [0, 128], sizes = [1, 128], strides = [1, 1]} : vector<1x512xf32> to vector<1x128xf32>
    %176 = arith.negf %175 : vector<1x128xf32>
    %177 = math.exp %176 : vector<1x128xf32>
    %cst_44 = arith.constant 1.000000e+00 : f32
    %178 = vector.broadcast %cst_44 : f32 to vector<1x128xf32>
    %179 = arith.addf %178, %177 : vector<1x128xf32>
    %180 = arith.divf %178, %179 : vector<1x128xf32>
    %181 = vector.extract_strided_slice %168 {offsets = [0, 256], sizes = [1, 128], strides = [1, 1]} : vector<1x512xf32> to vector<1x128xf32>
    %182 = math.tanh %181 : vector<1x128xf32>
    %183 = vector.extract_strided_slice %168 {offsets = [0, 384], sizes = [1, 128], strides = [1, 1]} : vector<1x512xf32> to vector<1x128xf32>
    %184 = arith.negf %183 : vector<1x128xf32>
    %185 = math.exp %184 : vector<1x128xf32>
    %cst_45 = arith.constant 1.000000e+00 : f32
    %186 = vector.broadcast %cst_45 : f32 to vector<1x128xf32>
    %187 = arith.addf %186, %185 : vector<1x128xf32>
    %188 = arith.divf %186, %187 : vector<1x128xf32>
    %189 = arith.mulf %180, %160 : vector<1x128xf32>
    %190 = arith.mulf %174, %182 : vector<1x128xf32>
    %191 = arith.addf %189, %190 : vector<1x128xf32>
    %192 = math.tanh %191 : vector<1x128xf32>
    %193 = arith.mulf %188, %192 : vector<1x128xf32>
    %194 = arith.index_cast %c5_i32 : i32 to index
    %c0_46 = arith.constant 0 : index
    %195 = vector.load %arg9[%194, %c0_46] : memref<8x128xf32, #tpu.memory_space<vmem>>, vector<1x128xf32>
    tpu.vector_store %arg9[%194, %c0_46], %193 {strides = array<i32>} : memref<8x128xf32, #tpu.memory_space<vmem>>, vector<1x128xf32>,
    %c6_i32 = arith.constant 6 : i32
    %196 = arith.index_cast %c6_i32 : i32 to index
    %c0_47 = arith.constant 0 : index
    %197 = vector.load %arg15[%196, %c0_47] : memref<8x512xf32, #tpu.memory_space<vmem>>, vector<1x512xf32>
    %cst_48 = arith.constant dense<0.000000e+00> : vector<1x512xf32>
    %198 = tpu.matmul %193, %7, %cst_48 {dimension_numbers = #tpu.dot_dimension_numbers<[1], [0], [0], [1], [0, 0, 1, 1], [], []>} : vector<1x128xf32>, vector<128x512xf32>, vector<1x512xf32> -> vector<1x512xf32>
    %199 = arith.addf %197, %198 : vector<1x512xf32>
    %200 = vector.extract_strided_slice %199 {offsets = [0, 0], sizes = [1, 128], strides = [1, 1]} : vector<1x512xf32> to vector<1x128xf32>
    %201 = arith.negf %200 : vector<1x128xf32>
    %202 = math.exp %201 : vector<1x128xf32>
    %cst_49 = arith.constant 1.000000e+00 : f32
    %203 = vector.broadcast %cst_49 : f32 to vector<1x128xf32>
    %204 = arith.addf %203, %202 : vector<1x128xf32>
    %205 = arith.divf %203, %204 : vector<1x128xf32>
    %206 = vector.extract_strided_slice %199 {offsets = [0, 128], sizes = [1, 128], strides = [1, 1]} : vector<1x512xf32> to vector<1x128xf32>
    %207 = arith.negf %206 : vector<1x128xf32>
    %208 = math.exp %207 : vector<1x128xf32>
    %cst_50 = arith.constant 1.000000e+00 : f32
    %209 = vector.broadcast %cst_50 : f32 to vector<1x128xf32>
    %210 = arith.addf %209, %208 : vector<1x128xf32>
    %211 = arith.divf %209, %210 : vector<1x128xf32>
    %212 = vector.extract_strided_slice %199 {offsets = [0, 256], sizes = [1, 128], strides = [1, 1]} : vector<1x512xf32> to vector<1x128xf32>
    %213 = math.tanh %212 : vector<1x128xf32>
    %214 = vector.extract_strided_slice %199 {offsets = [0, 384], sizes = [1, 128], strides = [1, 1]} : vector<1x512xf32> to vector<1x128xf32>
    %215 = arith.negf %214 : vector<1x128xf32>
    %216 = math.exp %215 : vector<1x128xf32>
    %cst_51 = arith.constant 1.000000e+00 : f32
    %217 = vector.broadcast %cst_51 : f32 to vector<1x128xf32>
    %218 = arith.addf %217, %216 : vector<1x128xf32>
    %219 = arith.divf %217, %218 : vector<1x128xf32>
    %220 = arith.mulf %211, %191 : vector<1x128xf32>
    %221 = arith.mulf %205, %213 : vector<1x128xf32>
    %222 = arith.addf %220, %221 : vector<1x128xf32>
    %223 = math.tanh %222 : vector<1x128xf32>
    %224 = arith.mulf %219, %223 : vector<1x128xf32>
    %225 = arith.index_cast %c6_i32 : i32 to index
    %c0_52 = arith.constant 0 : index
    %226 = vector.load %arg9[%225, %c0_52] : memref<8x128xf32, #tpu.memory_space<vmem>>, vector<1x128xf32>
    tpu.vector_store %arg9[%225, %c0_52], %224 {strides = array<i32>} : memref<8x128xf32, #tpu.memory_space<vmem>>, vector<1x128xf32>,
    %c7_i32 = arith.constant 7 : i32
    %227 = arith.index_cast %c7_i32 : i32 to index
    %c0_53 = arith.constant 0 : index
    %228 = vector.load %arg15[%227, %c0_53] : memref<8x512xf32, #tpu.memory_space<vmem>>, vector<1x512xf32>
    %cst_54 = arith.constant dense<0.000000e+00> : vector<1x512xf32>
    %229 = tpu.matmul %224, %7, %cst_54 {dimension_numbers = #tpu.dot_dimension_numbers<[1], [0], [0], [1], [0, 0, 1, 1], [], []>} : vector<1x128xf32>, vector<128x512xf32>, vector<1x512xf32> -> vector<1x512xf32>
    %230 = arith.addf %228, %229 : vector<1x512xf32>
    %231 = vector.extract_strided_slice %230 {offsets = [0, 0], sizes = [1, 128], strides = [1, 1]} : vector<1x512xf32> to vector<1x128xf32>
    %232 = arith.negf %231 : vector<1x128xf32>
    %233 = math.exp %232 : vector<1x128xf32>
    %cst_55 = arith.constant 1.000000e+00 : f32
    %234 = vector.broadcast %cst_55 : f32 to vector<1x128xf32>
    %235 = arith.addf %234, %233 : vector<1x128xf32>
    %236 = arith.divf %234, %235 : vector<1x128xf32>
    %237 = vector.extract_strided_slice %230 {offsets = [0, 128], sizes = [1, 128], strides = [1, 1]} : vector<1x512xf32> to vector<1x128xf32>
    %238 = arith.negf %237 : vector<1x128xf32>
    %239 = math.exp %238 : vector<1x128xf32>
    %cst_56 = arith.constant 1.000000e+00 : f32
    %240 = vector.broadcast %cst_56 : f32 to vector<1x128xf32>
    %241 = arith.addf %240, %239 : vector<1x128xf32>
    %242 = arith.divf %240, %241 : vector<1x128xf32>
    %243 = vector.extract_strided_slice %230 {offsets = [0, 256], sizes = [1, 128], strides = [1, 1]} : vector<1x512xf32> to vector<1x128xf32>
    %244 = math.tanh %243 : vector<1x128xf32>
    %245 = vector.extract_strided_slice %230 {offsets = [0, 384], sizes = [1, 128], strides = [1, 1]} : vector<1x512xf32> to vector<1x128xf32>
    %246 = arith.negf %245 : vector<1x128xf32>
    %247 = math.exp %246 : vector<1x128xf32>
    %cst_57 = arith.constant 1.000000e+00 : f32
    %248 = vector.broadcast %cst_57 : f32 to vector<1x128xf32>
    %249 = arith.addf %248, %247 : vector<1x128xf32>
    %250 = arith.divf %248, %249 : vector<1x128xf32>
    %251 = arith.mulf %242, %222 : vector<1x128xf32>
    %252 = arith.mulf %236, %244 : vector<1x128xf32>
    %253 = arith.addf %251, %252 : vector<1x128xf32>
    %254 = math.tanh %253 : vector<1x128xf32>
    %255 = arith.mulf %250, %254 : vector<1x128xf32>
    %256 = arith.index_cast %c7_i32 : i32 to index
    %c0_58 = arith.constant 0 : index
    %257 = vector.load %arg9[%256, %c0_58] : memref<8x128xf32, #tpu.memory_space<vmem>>, vector<1x128xf32>
    tpu.vector_store %arg9[%256, %c0_58], %255 {strides = array<i32>} : memref<8x128xf32, #tpu.memory_space<vmem>>, vector<1x128xf32>,
    %c8_i32 = arith.constant 8 : i32
    %c0_59 = arith.constant 0 : index
    %c0_60 = arith.constant 0 : index
    %258 = vector.load %arg11[%c0_59, %c0_60] : memref<1x128xf32, #tpu.memory_space<vmem>>, vector<1x128xf32>
    tpu.vector_store %arg11[%c0_59, %c0_60], %253 {strides = array<i32>} : memref<1x128xf32, #tpu.memory_space<vmem>>, vector<1x128xf32>,
    %c0_61 = arith.constant 0 : index
    %c0_62 = arith.constant 0 : index
    %259 = vector.load %arg9[%c0_61, %c0_62] : memref<8x128xf32, #tpu.memory_space<vmem>>, vector<8x128xf32>
    %c0_63 = arith.constant 0 : index
    %c0_64 = arith.constant 0 : index
    %260 = vector.load %arg5[%c0_63, %c0_64] : memref<128x128xf32, #tpu.memory_space<vmem>>, vector<128x128xf32>
    %cst_65 = arith.constant dense<0.000000e+00> : vector<8x128xf32>
    %261 = tpu.matmul %259, %260, %cst_65 {dimension_numbers = #tpu.dot_dimension_numbers<[1], [0], [0], [1], [0, 0, 1, 1], [], []>} : vector<8x128xf32>, vector<128x128xf32>, vector<8x128xf32> -> vector<8x128xf32>
    %c0_66 = arith.constant 0 : index
    %c0_67 = arith.constant 0 : index
    %262 = vector.load %arg6[%c0_66, %c0_67] : memref<1x128xf32, #tpu.memory_space<vmem>>, vector<1x128xf32>
    %263 = vector.broadcast %262 : vector<1x128xf32> to vector<8x128xf32>
    %264 = arith.addf %261, %263 : vector<8x128xf32>
    %c0_68 = arith.constant 0 : index
    %c0_69 = arith.constant 0 : index
    %265 = vector.load %arg10[%c0_68, %c0_69] : memref<8x128xf32, #tpu.memory_space<vmem>>, vector<8x128xf32>
    tpu.vector_store %arg10[%c0_68, %c0_69], %264 {strides = array<i32>} : memref<8x128xf32, #tpu.memory_space<vmem>>, vector<8x128xf32>,
    %c0_70 = arith.constant 0 : index
    %c0_71 = arith.constant 0 : index
    %266 = vector.load %arg9[%c0_70, %c0_71] : memref<8x128xf32, #tpu.memory_space<vmem>>, vector<8x128xf32>
    %267 = tpu.iota {dimensions = array<i32: 1>} : vector<8x128xi32>
    %c32_i32 = arith.constant 32 : i32
    %268 = vector.broadcast %c32_i32 : i32 to vector<8x128xi32>
    %269 = arith.cmpi slt, %267, %268 : vector<8x128xi32>
    %cst_72 = arith.constant 0xFF800000 : f32
    %270 = vector.broadcast %cst_72 : f32 to vector<8x128xf32>
    %271 = arith.select %269, %266, %270 : vector<8x128xi1>, vector<8x128xf32>
    %cst_73 = arith.constant dense<0xFF800000> : vector<8xf32>
    %272 = vector.multi_reduction <maximumf>, %271, %cst_73 [1] : vector<8x128xf32> to vector<8xf32>
    %273 = vector.shape_cast %272 : vector<8xf32> to vector<8x1xf32>
    %c0_74 = arith.constant 0 : index
    %c0_75 = arith.constant 0 : index
    %274 = vector.load %arg12[%c0_74, %c0_75] : memref<8x1xf32, #tpu.memory_space<vmem>>, vector<8x1xf32>
    tpu.vector_store %arg12[%c0_74, %c0_75], %273 {strides = array<i32>} : memref<8x1xf32, #tpu.memory_space<vmem>>, vector<8x1xf32>,
    %275 = vector.broadcast %273 : vector<8x1xf32> to vector<8x128xf32>
    %276 = arith.cmpf oeq, %271, %275 : vector<8x128xf32>
    %c128_i32 = arith.constant 128 : i32
    %277 = vector.broadcast %c128_i32 : i32 to vector<8x128xi32>
    %278 = arith.select %276, %267, %277 : vector<8x128xi1>, vector<8x128xi32>
    %cst_76 = arith.constant dense<2147483647> : vector<8xi32>
    %279 = vector.multi_reduction <minsi>, %278, %cst_76 [1] : vector<8x128xi32> to vector<8xi32>
    %280 = vector.shape_cast %279 : vector<8xi32> to vector<8x1xi32>
    %c0_77 = arith.constant 0 : index
    %c0_78 = arith.constant 0 : index
    %281 = vector.load %arg13[%c0_77, %c0_78] : memref<8x1xi32, #tpu.memory_space<vmem>>, vector<8x1xi32>
    tpu.vector_store %arg13[%c0_77, %c0_78], %280 {strides = array<i32>} : memref<8x1xi32, #tpu.memory_space<vmem>>, vector<8x1xi32>,
    %c0_79 = arith.constant 0 : index
    %c0_80 = arith.constant 0 : index
    %282 = vector.load %arg7[%c0_79, %c0_80] : memref<1x128xf32, #tpu.memory_space<vmem>>, vector<1x128xf32>
    %283 = arith.mulf %255, %282 : vector<1x128xf32>
    %cst_81 = arith.constant dense<0.000000e+00> : vector<1xf32>
    %284 = vector.multi_reduction <add>, %283, %cst_81 [1] : vector<1x128xf32> to vector<1xf32>
    %285 = vector.shape_cast %284 : vector<1xf32> to vector<1x1xf32>
    %c0_82 = arith.constant 0 : index
    %c0_83 = arith.constant 0 : index
    %286 = vector.load %arg8[%c0_82, %c0_83] : memref<1x1xf32, #tpu.memory_space<vmem>>, vector<1x1xf32>
    %287 = arith.addf %285, %286 : vector<1x1xf32>
    %c0_84 = arith.constant 0 : index
    %c0_85 = arith.constant 0 : index
    %288 = vector.load %arg14[%c0_84, %c0_85] : memref<1x1xf32, #tpu.memory_space<vmem>>, vector<1x1xf32>
    tpu.vector_store %arg14[%c0_84, %c0_85], %287 {strides = array<i32>} : memref<1x1xf32, #tpu.memory_space<vmem>>, vector<1x1xf32>,
    return
  }
  func.func @transform_0(%arg0: i32) -> (i32, i32) {
    %c0_i32 = arith.constant 0 : i32
    %c0_i32_0 = arith.constant 0 : i32
    %c0_i32_1 = arith.constant 0 : i32
    return %c0_i32, %c0_i32_0 : i32, i32
  }
  func.func @transform_1(%arg0: i32) -> (i32, i32) {
    %c0_i32 = arith.constant 0 : i32
    %c0_i32_0 = arith.constant 0 : i32
    %c0_i32_1 = arith.constant 0 : i32
    return %c0_i32, %c0_i32_0 : i32, i32
  }
  func.func @transform_2(%arg0: i32) -> (i32, i32) {
    %c0_i32 = arith.constant 0 : i32
    %c0_i32_0 = arith.constant 0 : i32
    %c0_i32_1 = arith.constant 0 : i32
    return %c0_i32, %c0_i32_0 : i32, i32
  }
  func.func @transform_3(%arg0: i32) -> (i32, i32) {
    %c0_i32 = arith.constant 0 : i32
    %c0_i32_0 = arith.constant 0 : i32
    %c0_i32_1 = arith.constant 0 : i32
    return %c0_i32, %c0_i32_0 : i32, i32
  }
  func.func @transform_4(%arg0: i32) -> (i32, i32) {
    %c0_i32 = arith.constant 0 : i32
    %c0_i32_0 = arith.constant 0 : i32
    %c0_i32_1 = arith.constant 0 : i32
    return %c0_i32, %c0_i32_0 : i32, i32
  }
  func.func @transform_5(%arg0: i32) -> (i32, i32) {
    %c0_i32 = arith.constant 0 : i32
    %c0_i32_0 = arith.constant 0 : i32
    %c0_i32_1 = arith.constant 0 : i32
    return %c0_i32, %c0_i32_0 : i32, i32
  }
  func.func @transform_6(%arg0: i32) -> (i32, i32) {
    %c0_i32 = arith.constant 0 : i32
    %c0_i32_0 = arith.constant 0 : i32
    %c0_i32_1 = arith.constant 0 : i32
    return %c0_i32, %c0_i32_0 : i32, i32
  }
  func.func @transform_7(%arg0: i32) -> (i32, i32) {
    %c0_i32 = arith.constant 0 : i32
    %c0_i32_0 = arith.constant 0 : i32
    %c0_i32_1 = arith.constant 0 : i32
    return %c0_i32, %c0_i32_0 : i32, i32
  }
  func.func @transform_8(%arg0: i32) -> (i32, i32) {
    %c0_i32 = arith.constant 0 : i32
    %c0_i32_0 = arith.constant 0 : i32
    %c0_i32_1 = arith.constant 0 : i32
    return %c0_i32, %c0_i32_0 : i32, i32
  }
  func.func @transform_9(%arg0: i32) -> (i32, i32) {
    %c0_i32 = arith.constant 0 : i32
    %c0_i32_0 = arith.constant 0 : i32
    %c0_i32_1 = arith.constant 0 : i32
    return %c0_i32, %c0_i32_0 : i32, i32
  }
  func.func @transform_10(%arg0: i32) -> (i32, i32) {
    %c0_i32 = arith.constant 0 : i32
    %c0_i32_0 = arith.constant 0 : i32
    %c0_i32_1 = arith.constant 0 : i32
    return %c0_i32, %c0_i32_0 : i32, i32
  }
  func.func @transform_11(%arg0: i32) -> (i32, i32) {
    %c0_i32 = arith.constant 0 : i32
    %c0_i32_0 = arith.constant 0 : i32
    %c0_i32_1 = arith.constant 0 : i32
    return %c0_i32, %c0_i32_0 : i32, i32
  }
  func.func @transform_12(%arg0: i32) -> (i32, i32) {
    %c0_i32 = arith.constant 0 : i32
    %c0_i32_0 = arith.constant 0 : i32
    %c0_i32_1 = arith.constant 0 : i32
    return %c0_i32, %c0_i32_0 : i32, i32
  }
  func.func @transform_13(%arg0: i32) -> (i32, i32) {
    %c0_i32 = arith.constant 0 : i32
    %c0_i32_0 = arith.constant 0 : i32
    %c0_i32_1 = arith.constant 0 : i32
    return %c0_i32, %c0_i32_0 : i32, i32
  }
}

</mosaic_0001>

<llo_original>
// kernel: lstm_classifier_forward.1
$region0: #{lstm_classifier_forward.1}
  #allocation0 [shape = 'u32[]', space=smem, size = 0x4, offset = 0x4, fixed_abs, tag = 'smem constant byte address 0x4 - core index']
  #allocation1 [shape = 'u32[144,128]{1,0:T(1,128)}', space=vmem, size = 0x12000, scoped, tag = 'internal scratch']
  #allocation2 [shape = 'f32[8,512]{1,0:T(8,128)}', space=vmem, size = 0x4000, scoped, tag = 'scratch operand']
  #allocation3 [shape = 'f32[1,1]{1,0:T(1,128)S(1)}', space=vmem, size = 0x200, scoped, tag = 'scoped memory for lstm_classifier_forward.1']
  %s0 = inlined_call_operand.vmem [shape: f32[8,32], index: 0, kind: input, shape index: {}]
  %s1 = inlined_call_operand.vmem [shape: f32[32,512], index: 1, kind: input, shape index: {}]
  %s2 = inlined_call_operand.vmem [shape: f32[128,512], index: 2, kind: input, shape index: {}]
  %s3 = inlined_call_operand.vmem [shape: f32[1,512], index: 3, kind: input, shape index: {}]
  %s4 = inlined_call_operand.vmem [shape: f32[128,128], index: 4, kind: input, shape index: {}]
  %s5 = inlined_call_operand.vmem [shape: f32[1,128], index: 5, kind: input, shape index: {}]
  %s6 = inlined_call_operand.vmem [shape: f32[1,128], index: 6, kind: input, shape index: {}]
  %s7 = inlined_call_operand.<no memory space> [shape: f32[1,1], index: 7, kind: input, shape index: {}]
  %s8 = inlined_call_operand.vmem [shape: f32[8,128], index: 8, kind: output, shape index: {0}]
  %s9 = inlined_call_operand.hbm [shape: f32[8,128], index: 9, kind: output, shape index: {1}]
  %s10 = inlined_call_operand.vmem [shape: f32[1,128], index: 10, kind: output, shape index: {2}]
  %s11 = inlined_call_operand.vmem [shape: f32[8,1], index: 11, kind: output, shape index: {3}]
  %s12 = inlined_call_operand.vmem [shape: s32[8,1], index: 12, kind: output, shape index: {4}]
  %s13 = inlined_call_operand.hbm [shape: f32[1,1], index: 13, kind: output, shape index: {5}]
  %14 = xla_tuple %s8, %s9, %s10, %s11, %s12, %s13
  %s15 = sld [smem:[#allocation0]]
  $region82: #{lstm_classifier_forward.1} parent=0
    _
  %s17 = ssub.s32 1, %s15
  %s18 = scalar_select 0, %s17, %s15
  %v19 = vstv %s7
  %20 = vst [vmem:[#allocation3] sm:$0x1] %v19
  $region1: #{lstm_classifier_forward.1} parent=0
    #allocation4 [shape = 'u8[4096]{0}', space=vmem, size = 0x1000, scoped, tag = 'output window, operand 1, single buffered']
    #allocation5 [shape = 's32[1]{0}', space=sflag, size = 0x4, scoped, tag = 'scoped memory for lstm_classifier_forward.1']
    #allocation6 [shape = 'u8[512]{0}', space=vmem, size = 0x400, scoped, tag = 'output window, operand 5, single buffered']
    #allocation7 [shape = 's32[1]{0}', space=sflag, size = 0x4, scoped, tag = 'scoped memory for lstm_classifier_forward.1']
    %21 = vsyncpa [#allocation5], 0
    %22 = vsyncpa [#allocation7], 0
    // Predicated region
    $region2: #{lstm_classifier_forward.1} parent=1 // pred_check
      _
    $region3: #{lstm_classifier_forward.1} parent=1 // pred_check_branch
      %24 = sbr.rel (0) target = $region5
    $region4: #{lstm_classifier_forward.1} parent=1 // pred_region
      _
    $region5: #{lstm_classifier_forward.1} parent=1 // pred_fallthru
      _
    // Predicated region
    $region6: #{lstm_classifier_forward.1} parent=1 // pred_check
      _
    $region7: #{lstm_classifier_forward.1} parent=1 // pred_check_branch
      %26 = sbr.rel (0) target = $region9
    $region8: #{lstm_classifier_forward.1} parent=1 // pred_region
      _
    $region9: #{lstm_classifier_forward.1} parent=1 // pred_fallthru
      _
    // Predicated region
    $region10: #{lstm_classifier_forward.1} parent=1 // pred_check
      _
    $region11: #{lstm_classifier_forward.1} parent=1 // pred_check_branch
      %28 = sbr.rel (0) target = $region13
    $region12: #{lstm_classifier_forward.1} parent=1 // pred_region
      _
    $region13: #{lstm_classifier_forward.1} parent=1 // pred_fallthru
      _
    // Predicated region
    $region14: #{lstm_classifier_forward.1} parent=1 // pred_check
      _
    $region15: #{lstm_classifier_forward.1} parent=1 // pred_check_branch
      %30 = sbr.rel (0) target = $region17
    $region16: #{lstm_classifier_forward.1} parent=1 // pred_region
      _
    $region17: #{lstm_classifier_forward.1} parent=1 // pred_fallthru
      _
    // Predicated region
    $region18: #{lstm_classifier_forward.1} parent=1 // pred_check
      _
    $region19: #{lstm_classifier_forward.1} parent=1 // pred_check_branch
      %32 = sbr.rel (0) target = $region21
    $region20: #{lstm_classifier_forward.1} parent=1 // pred_region
      _
    $region21: #{lstm_classifier_forward.1} parent=1 // pred_fallthru
      _
    // Predicated region
    $region22: #{lstm_classifier_forward.1} parent=1 // pred_check
      _
    $region23: #{lstm_classifier_forward.1} parent=1 // pred_check_branch
      %34 = sbr.rel (0) target = $region25
    $region24: #{lstm_classifier_forward.1} parent=1 // pred_region
      _
    $region25: #{lstm_classifier_forward.1} parent=1 // pred_fallthru
      _
    // Predicated region
    $region26: #{lstm_classifier_forward.1} parent=1 // pred_check
      _
    $region27: #{lstm_classifier_forward.1} parent=1 // pred_check_branch
      %36 = sbr.rel (0) target = $region29
    $region28: #{lstm_classifier_forward.1} parent=1 // pred_region
      _
    $region29: #{lstm_classifier_forward.1} parent=1 // pred_fallthru
      _
    // Predicated region
    $region30: #{lstm_classifier_forward.1} parent=1 // pred_check
      _
    $region31: #{lstm_classifier_forward.1} parent=1 // pred_check_branch
      %38 = sbr.rel (0) target = $region33
    $region32: #{lstm_classifier_forward.1} parent=1 // pred_region
      _
    $region33: #{lstm_classifier_forward.1} parent=1 // pred_fallthru
      _
    %v39 = vld [vmem:[%s0] sm:$0xff]
    %v40 = vld [vmem:[%s1] sm:$0xff]
    %v41 = vld [vmem:[%s1 + $0x8] sm:$0xff]
    %v42 = vld [vmem:[%s1 + $0x10] sm:$0xff]
    %v43 = vld [vmem:[%s1 + $0x18] sm:$0xff]
    %v44 = vld [vmem:[%s1 + $0x20] sm:$0xff]
    %v45 = vld [vmem:[%s1 + $0x28] sm:$0xff]
    %v46 = vld [vmem:[%s1 + $0x30] sm:$0xff]
    %v47 = vld [vmem:[%s1 + $0x38] sm:$0xff]
    %v48 = vld [vmem:[%s1 + $0x40] sm:$0xff]
    %v49 = vld [vmem:[%s1 + $0x48] sm:$0xff]
    %v50 = vld [vmem:[%s1 + $0x50] sm:$0xff]
    %v51 = vld [vmem:[%s1 + $0x58] sm:$0xff]
    %v52 = vld [vmem:[%s1 + $0x60] sm:$0xff]
    %v53 = vld [vmem:[%s1 + $0x68] sm:$0xff]
    %v54 = vld [vmem:[%s1 + $0x70] sm:$0xff]
    %v55 = vld [vmem:[%s1 + $0x78] sm:$0xff]
    %v56 = vld [vmem:[%s3] sm:$0xf]
    %v58 = vlaneseq
    %v59 = vshrl.u32 %v58, 7
    %v60 = vsub.s32 0, %v59
    %v61 = vrot.slane %v56, %v60
    %v62 = vlaneseq
    %v63 = vshrl.u32 %v62, 7
    %v64 = vsub.s32 1, %v63
    %v65 = vrot.slane %v56, %v64
    %v66 = vlaneseq
    %v67 = vshrl.u32 %v66, 7
    %v68 = vsub.s32 2, %v67
    %v69 = vrot.slane %v56, %v68
    %v70 = vlaneseq
    %v71 = vshrl.u32 %v70, 7
    %v72 = vsub.s32 3, %v71
    %v73 = vrot.slane %v56, %v72
    %vm78 = vcmask 261120
    %v80 = vsel %vm78, %v39, 0
    %82 = vmatprep.subr.mxu0 0.0
    %83 = vmatpush1.msra.mxu0 0.0
    %84 = vmatprep.subr.mxu0 0.0
    %85 = vmatpush1.msra.mxu0 0.0
    %86 = vmatprep.subr.mxu0 0.0
    %87 = vmatpush1.msra.mxu0 0.0
    %88 = vmatprep.subr.mxu0 0.0
    %89 = vmatpush1.msra.mxu0 0.0
    %90 = vmatprep.subr.mxu0 0.0
    %91 = vmatpush1.msra.mxu0 0.0
    %92 = vmatprep.subr.mxu0 0.0
    %93 = vmatpush1.msra.mxu0 0.0
    %94 = vmatprep.subr.mxu0 0.0
    %95 = vmatpush1.msra.mxu0 0.0
    %96 = vmatprep.subr.mxu0 0.0
    %97 = vmatpush1.msra.mxu0 0.0
    %98 = vmatprep.subr.mxu0 0.0
    %99 = vmatpush1.msra.mxu0 0.0
    %100 = vmatprep.subr.mxu0 0.0
    %101 = vmatpush1.msra.mxu0 0.0
    %102 = vmatprep.subr.mxu0 0.0
    %103 = vmatpush1.msra.mxu0 0.0
    %104 = vmatprep.subr.mxu0 0.0
    %105 = vmatpush1.msra.mxu0 0.0
    %106 = vmatprep.subr.mxu0 %v53
    %107 = vmatpush1.msra.mxu0 %v52
    %108 = vmatprep.subr.mxu0 %v49
    %109 = vmatpush1.msra.mxu0 %v48
    %110 = vmatprep.subr.mxu0 %v45
    %111 = vmatpush1.msra.mxu0 %v44
    %112 = vmatprep.subr.mxu0 %v41
    %113 = vmatpush1.msra.mxu0 %v40
    %114 = vmatprep.subr.mxu0 0.0
    %115 = vmatpush2.msra.mxu0 0.0
    %116 = vmatprep.subr.mxu0 0.0
    %117 = vmatpush2.msra.mxu0 0.0
    %118 = vmatprep.subr.mxu0 0.0
    %119 = vmatpush2.msra.mxu0 0.0
    %120 = vmatprep.subr.mxu0 0.0
    %121 = vmatpush2.msra.mxu0 0.0
    %122 = vmatprep.subr.mxu0 0.0
    %123 = vmatpush2.msra.mxu0 0.0
    %124 = vmatprep.subr.mxu0 0.0
    %125 = vmatpush2.msra.mxu0 0.0
    %126 = vmatprep.subr.mxu0 0.0
    %127 = vmatpush2.msra.mxu0 0.0
    %128 = vmatprep.subr.mxu0 0.0
    %129 = vmatpush2.msra.mxu0 0.0
    %130 = vmatprep.subr.mxu0 0.0
    %131 = vmatpush2.msra.mxu0 0.0
    %132 = vmatprep.subr.mxu0 0.0
    %133 = vmatpush2.msra.mxu0 0.0
    %134 = vmatprep.subr.mxu0 0.0
    %135 = vmatpush2.msra.mxu0 0.0
    %136 = vmatprep.subr.mxu0 0.0
    %137 = vmatpush2.msra.mxu0 0.0
    %138 = vmatprep.subr.mxu0 0.0
    %139 = vmatpush2.msra.mxu0 0.0
    %140 = vmatprep.subr.mxu0 0.0
    %141 = vmatpush2.msra.mxu0 0.0
    %142 = vmatprep.subr.mxu0 0.0
    %143 = vmatpush2.msra.mxu0 0.0
    %144 = vmatprep.subr.mxu0 0.0
    %145 = vmatpush2.msra.mxu0 0.0
    %146 = vmatprep.mubr.f32.mxu0 0.0
    %147 = vmatmul.mubr.f32.gmra.mxu0 %v80
    %v148 = vpop.f32.mrf.mxu0
    %v149 = vadd.f32 %v61, %v148
    %v150 = vpop.f32.mrf.mxu0
    %v151 = vadd.f32 %v65, %v150
    %152 = vdwg.mxu0
    %153 = vmatprep.subr.mxu0 0.0
    %154 = vmatpush1.msra.mxu0 0.0
    %155 = vmatprep.subr.mxu0 0.0
    %156 = vmatpush1.msra.mxu0 0.0
    %157 = vmatprep.subr.mxu0 0.0
    %158 = vmatpush1.msra.mxu0 0.0
    %159 = vmatprep.subr.mxu0 0.0
    %160 = vmatpush1.msra.mxu0 0.0
    %161 = vmatprep.subr.mxu0 0.0
    %162 = vmatpush1.msra.mxu0 0.0
    %163 = vmatprep.subr.mxu0 0.0
    %164 = vmatpush1.msra.mxu0 0.0
    %165 = vmatprep.subr.mxu0 0.0
    %166 = vmatpush1.msra.mxu0 0.0
    %167 = vmatprep.subr.mxu0 0.0
    %168 = vmatpush1.msra.mxu0 0.0
    %169 = vmatprep.subr.mxu0 0.0
    %170 = vmatpush1.msra.mxu0 0.0
    %171 = vmatprep.subr.mxu0 0.0
    %172 = vmatpush1.msra.mxu0 0.0
    %173 = vmatprep.subr.mxu0 0.0
    %174 = vmatpush1.msra.mxu0 0.0
    %175 = vmatprep.subr.mxu0 0.0
    %176 = vmatpush1.msra.mxu0 0.0
    %177 = vmatprep.subr.mxu0 %v55
    %178 = vmatpush1.msra.mxu0 %v54
    %179 = vmatprep.subr.mxu0 %v51
    %180 = vmatpush1.msra.mxu0 %v50
    %181 = vmatprep.subr.mxu0 %v47
    %182 = vmatpush1.msra.mxu0 %v46
    %183 = vmatprep.subr.mxu0 %v43
    %184 = vmatpush1.msra.mxu0 %v42
    %185 = vmatprep.subr.mxu0 0.0
    %186 = vmatpush2.msra.mxu0 0.0
    %187 = vmatprep.subr.mxu0 0.0
    %188 = vmatpush2.msra.mxu0 0.0
    %189 = vmatprep.subr.mxu0 0.0
    %190 = vmatpush2.msra.mxu0 0.0
    %191 = vmatprep.subr.mxu0 0.0
    %192 = vmatpush2.msra.mxu0 0.0
    %193 = vmatprep.subr.mxu0 0.0
    %194 = vmatpush2.msra.mxu0 0.0
    %195 = vmatprep.subr.mxu0 0.0
    %196 = vmatpush2.msra.mxu0 0.0
    %197 = vmatprep.subr.mxu0 0.0
    %198 = vmatpush2.msra.mxu0 0.0
    %199 = vmatprep.subr.mxu0 0.0
    %200 = vmatpush2.msra.mxu0 0.0
    %201 = vmatprep.subr.mxu0 0.0
    %202 = vmatpush2.msra.mxu0 0.0
    %203 = vmatprep.subr.mxu0 0.0
    %204 = vmatpush2.msra.mxu0 0.0
    %205 = vmatprep.subr.mxu0 0.0
    %206 = vmatpush2.msra.mxu0 0.0
    %207 = vmatprep.subr.mxu0 0.0
    %208 = vmatpush2.msra.mxu0 0.0
    %209 = vmatprep.subr.mxu0 0.0
    %210 = vmatpush2.msra.mxu0 0.0
    %211 = vmatprep.subr.mxu0 0.0
    %212 = vmatpush2.msra.mxu0 0.0
    %213 = vmatprep.subr.mxu0 0.0
    %214 = vmatpush2.msra.mxu0 0.0
    %215 = vmatprep.subr.mxu0 0.0
    %216 = vmatpush2.msra.mxu0 0.0
    %217 = vmatprep.mubr.f32.mxu0 0.0
    %218 = vmatmul.mubr.f32.gmra.mxu0 %v80
    %v219 = vpop.f32.mrf.mxu0
    %v220 = vadd.f32 %v69, %v219
    %v221 = vpop.f32.mrf.mxu0
    %v222 = vadd.f32 %v73, %v221
    %223 = vdwg.mxu0
    %224 = vst [vmem:[#allocation2] sm:$0xff] %v149
    %225 = vst [vmem:[#allocation2 + $0x8] sm:$0xff] %v151
    %226 = vst [vmem:[#allocation2 + $0x10] sm:$0xff] %v220
    %227 = vst [vmem:[#allocation2 + $0x18] sm:$0xff] %v222
    %v228 = vld [vmem:[%s2] sm:$0xff]
    %v229 = vld [vmem:[%s2 + $0x8] sm:$0xff]
    %v230 = vld [vmem:[%s2 + $0x10] sm:$0xff]
    %v231 = vld [vmem:[%s2 + $0x18] sm:$0xff]
    %v232 = vld [vmem:[%s2 + $0x20] sm:$0xff]
    %v233 = vld [vmem:[%s2 + $0x28] sm:$0xff]
    %v234 = vld [vmem:[%s2 + $0x30] sm:$0xff]
    %v235 = vld [vmem:[%s2 + $0x38] sm:$0xff]
    %v236 = vld [vmem:[%s2 + $0x40] sm:$0xff]
    %v237 = vld [vmem:[%s2 + $0x48] sm:$0xff]
    %v238 = vld [vmem:[%s2 + $0x50] sm:$0xff]
    %v239 = vld [vmem:[%s2 + $0x58] sm:$0xff]
    %v240 = vld [vmem:[%s2 + $0x60] sm:$0xff]
    %v241 = vld [vmem:[%s2 + $0x68] sm:$0xff]
    %v242 = vld [vmem:[%s2 + $0x70] sm:$0xff]
    %v243 = vld [vmem:[%s2 + $0x78] sm:$0xff]
    %v244 = vld [vmem:[%s2 + $0x80] sm:$0xff]
    %v245 = vld [vmem:[%s2 + $0x88] sm:$0xff]
    %v246 = vld [vmem:[%s2 + $0x90] sm:$0xff]
    %v247 = vld [vmem:[%s2 + $0x98] sm:$0xff]
    %v248 = vld [vmem:[%s2 + $0xa0] sm:$0xff]
    %v249 = vld [vmem:[%s2 + $0xa8] sm:$0xff]
    %v250 = vld [vmem:[%s2 + $0xb0] sm:$0xff]
    %v251 = vld [vmem:[%s2 + $0xb8] sm:$0xff]
    %v252 = vld [vmem:[%s2 + $0xc0] sm:$0xff]
    %v253 = vld [vmem:[%s2 + $0xc8] sm:$0xff]
    %v254 = vld [vmem:[%s2 + $0xd0] sm:$0xff]
    %v255 = vld [vmem:[%s2 + $0xd8] sm:$0xff]
    %v256 = vld [vmem:[%s2 + $0xe0] sm:$0xff]
    %v257 = vld [vmem:[%s2 + $0xe8] sm:$0xff]
    %v258 = vld [vmem:[%s2 + $0xf0] sm:$0xff]
    %v259 = vld [vmem:[%s2 + $0xf8] sm:$0xff]
    %v260 = vld [vmem:[%s2 + $0x100] sm:$0xff]
    %v261 = vld [vmem:[%s2 + $0x108] sm:$0xff]
    %v262 = vld [vmem:[%s2 + $0x110] sm:$0xff]
    %v263 = vld [vmem:[%s2 + $0x118] sm:$0xff]
    %v264 = vld [vmem:[%s2 + $0x120] sm:$0xff]
    %v265 = vld [vmem:[%s2 + $0x128] sm:$0xff]
    %v266 = vld [vmem:[%s2 + $0x130] sm:$0xff]
    %v267 = vld [vmem:[%s2 + $0x138] sm:$0xff]
    %v268 = vld [vmem:[%s2 + $0x140] sm:$0xff]
    %v269 = vld [vmem:[%s2 + $0x148] sm:$0xff]
    %v270 = vld [vmem:[%s2 + $0x150] sm:$0xff]
    %v271 = vld [vmem:[%s2 + $0x158] sm:$0xff]
    %v272 = vld [vmem:[%s2 + $0x160] sm:$0xff]
    %v273 = vld [vmem:[%s2 + $0x168] sm:$0xff]
    %v274 = vld [vmem:[%s2 + $0x170] sm:$0xff]
    %v275 = vld [vmem:[%s2 + $0x178] sm:$0xff]
    %v276 = vld [vmem:[%s2 + $0x180] sm:$0xff]
    %v277 = vld [vmem:[%s2 + $0x188] sm:$0xff]
    %v278 = vld [vmem:[%s2 + $0x190] sm:$0xff]
    %v279 = vld [vmem:[%s2 + $0x198] sm:$0xff]
    %v280 = vld [vmem:[%s2 + $0x1a0] sm:$0xff]
    %v281 = vld [vmem:[%s2 + $0x1a8] sm:$0xff]
    %v282 = vld [vmem:[%s2 + $0x1b0] sm:$0xff]
    %v283 = vld [vmem:[%s2 + $0x1b8] sm:$0xff]
    %v284 = vld [vmem:[%s2 + $0x1c0] sm:$0xff]
    %v285 = vld [vmem:[%s2 + $0x1c8] sm:$0xff]
    %v286 = vld [vmem:[%s2 + $0x1d0] sm:$0xff]
    %v287 = vld [vmem:[%s2 + $0x1d8] sm:$0xff]
    %v288 = vld [vmem:[%s2 + $0x1e0] sm:$0xff]
    %v289 = vld [vmem:[%s2 + $0x1e8] sm:$0xff]
    %v290 = vld [vmem:[%s2 + $0x1f0] sm:$0xff]
    %v291 = vld [vmem:[%s2 + $0x1f8] sm:$0xff]
    %v292 = vld [vmem:[#allocation2] ss:$8 sm:$0xf]
    %293 = vmatprep.subr.mxu0 %v289
    %294 = vmatpush1.msra.mxu0 %v288
    %295 = vmatprep.subr.mxu0 %v285
    %296 = vmatpush1.msra.mxu0 %v284
    %297 = vmatprep.subr.mxu0 %v281
    %298 = vmatpush1.msra.mxu0 %v280
    %299 = vmatprep.subr.mxu0 %v277
    %300 = vmatpush1.msra.mxu0 %v276
    %301 = vmatprep.subr.mxu0 %v273
    %302 = vmatpush1.msra.mxu0 %v272
    %303 = vmatprep.subr.mxu0 %v269
    %304 = vmatpush1.msra.mxu0 %v268
    %305 = vmatprep.subr.mxu0 %v265
    %306 = vmatpush1.msra.mxu0 %v264
    %307 = vmatprep.subr.mxu0 %v261
    %308 = vmatpush1.msra.mxu0 %v260
    %309 = vmatprep.subr.mxu0 %v257
    %310 = vmatpush1.msra.mxu0 %v256
    %311 = vmatprep.subr.mxu0 %v253
    %312 = vmatpush1.msra.mxu0 %v252
    %313 = vmatprep.subr.mxu0 %v249
    %314 = vmatpush1.msra.mxu0 %v248
    %315 = vmatprep.subr.mxu0 %v245
    %316 = vmatpush1.msra.mxu0 %v244
    %317 = vmatprep.subr.mxu0 %v241
    %318 = vmatpush1.msra.mxu0 %v240
    %319 = vmatprep.subr.mxu0 %v237
    %320 = vmatpush1.msra.mxu0 %v236
    %321 = vmatprep.subr.mxu0 %v233
    %322 = vmatpush1.msra.mxu0 %v232
    %323 = vmatprep.subr.mxu0 %v229
    %324 = vmatpush1.msra.mxu0 %v228
    %325 = vmatprep.subr.mxu0 0.0
    %326 = vmatpush2.msra.mxu0 0.0
    %327 = vmatprep.subr.mxu0 0.0
    %328 = vmatpush2.msra.mxu0 0.0
    %329 = vmatprep.subr.mxu0 0.0
    %330 = vmatpush2.msra.mxu0 0.0
    %331 = vmatprep.subr.mxu0 0.0
    %332 = vmatpush2.msra.mxu0 0.0
    %333 = vmatprep.subr.mxu0 0.0
    %334 = vmatpush2.msra.mxu0 0.0
    %335 = vmatprep.subr.mxu0 0.0
    %336 = vmatpush2.msra.mxu0 0.0
    %337 = vmatprep.subr.mxu0 0.0
    %338 = vmatpush2.msra.mxu0 0.0
    %339 = vmatprep.subr.mxu0 0.0
    %340 = vmatpush2.msra.mxu0 0.0
    %341 = vmatprep.subr.mxu0 0.0
    %342 = vmatpush2.msra.mxu0 0.0
    %343 = vmatprep.subr.mxu0 0.0
    %344 = vmatpush2.msra.mxu0 0.0
    %345 = vmatprep.subr.mxu0 0.0
    %346 = vmatpush2.msra.mxu0 0.0
    %347 = vmatprep.subr.mxu0 0.0
    %348 = vmatpush2.msra.mxu0 0.0
    %349 = vmatprep.subr.mxu0 0.0
    %350 = vmatpush2.msra.mxu0 0.0
    %351 = vmatprep.subr.mxu0 0.0
    %352 = vmatpush2.msra.mxu0 0.0
    %353 = vmatprep.subr.mxu0 0.0
    %354 = vmatpush2.msra.mxu0 0.0
    %355 = vmatprep.subr.mxu0 0.0
    %356 = vmatpush2.msra.mxu0 0.0
    %357 = vmatprep.mubr.f32.mxu0 0.0
    %358 = vmatmul.mubr.f32.gmra.mxu0 0.0
    %v359 = vpop.f32.mrf.mxu0
    %v360 = vadd.f32 0.0, %v359
    %v361 = vpop.f32.mrf.mxu0
    %v362 = vadd.f32 0.0, %v361
    %363 = vdwg.mxu0
    %364 = vmatprep.subr.mxu0 %v291
    %365 = vmatpush1.msra.mxu0 %v290
    %366 = vmatprep.subr.mxu0 %v287
    %367 = vmatpush1.msra.mxu0 %v286
    %368 = vmatprep.subr.mxu0 %v283
    %369 = vmatpush1.msra.mxu0 %v282
    %370 = vmatprep.subr.mxu0 %v279
    %371 = vmatpush1.msra.mxu0 %v278
    %372 = vmatprep.subr.mxu0 %v275
    %373 = vmatpush1.msra.mxu0 %v274
    %374 = vmatprep.subr.mxu0 %v271
    %375 = vmatpush1.msra.mxu0 %v270
    %376 = vmatprep.subr.mxu0 %v267
    %377 = vmatpush1.msra.mxu0 %v266
    %378 = vmatprep.subr.mxu0 %v263
    %379 = vmatpush1.msra.mxu0 %v262
    %380 = vmatprep.subr.mxu0 %v259
    %381 = vmatpush1.msra.mxu0 %v258
    %382 = vmatprep.subr.mxu0 %v255
    %383 = vmatpush1.msra.mxu0 %v254
    %384 = vmatprep.subr.mxu0 %v251
    %385 = vmatpush1.msra.mxu0 %v250
    %386 = vmatprep.subr.mxu0 %v247
    %387 = vmatpush1.msra.mxu0 %v246
    %388 = vmatprep.subr.mxu0 %v243
    %389 = vmatpush1.msra.mxu0 %v242
    %390 = vmatprep.subr.mxu0 %v239
    %391 = vmatpush1.msra.mxu0 %v238
    %392 = vmatprep.subr.mxu0 %v235
    %393 = vmatpush1.msra.mxu0 %v234
    %394 = vmatprep.subr.mxu0 %v231
    %395 = vmatpush1.msra.mxu0 %v230
    %396 = vmatprep.subr.mxu0 0.0
    %397 = vmatpush2.msra.mxu0 0.0
    %398 = vmatprep.subr.mxu0 0.0
    %399 = vmatpush2.msra.mxu0 0.0
    %400 = vmatprep.subr.mxu0 0.0
    %401 = vmatpush2.msra.mxu0 0.0
    %402 = vmatprep.subr.mxu0 0.0
    %403 = vmatpush2.msra.mxu0 0.0
    %404 = vmatprep.subr.mxu0 0.0
    %405 = vmatpush2.msra.mxu0 0.0
    %406 = vmatprep.subr.mxu0 0.0
    %407 = vmatpush2.msra.mxu0 0.0
    %408 = vmatprep.subr.mxu0 0.0
    %409 = vmatpush2.msra.mxu0 0.0
    %410 = vmatprep.subr.mxu0 0.0
    %411 = vmatpush2.msra.mxu0 0.0
    %412 = vmatprep.subr.mxu0 0.0
    %413 = vmatpush2.msra.mxu0 0.0
    %414 = vmatprep.subr.mxu0 0.0
    %415 = vmatpush2.msra.mxu0 0.0
    %416 = vmatprep.subr.mxu0 0.0
    %417 = vmatpush2.msra.mxu0 0.0
    %418 = vmatprep.subr.mxu0 0.0
    %419 = vmatpush2.msra.mxu0 0.0
    %420 = vmatprep.subr.mxu0 0.0
    %421 = vmatpush2.msra.mxu0 0.0
    %422 = vmatprep.subr.mxu0 0.0
    %423 = vmatpush2.msra.mxu0 0.0
    %424 = vmatprep.subr.mxu0 0.0
    %425 = vmatpush2.msra.mxu0 0.0
    %426 = vmatprep.subr.mxu0 0.0
    %427 = vmatpush2.msra.mxu0 0.0
    %428 = vmatprep.mubr.f32.mxu0 0.0
    %429 = vmatmul.mubr.f32.gmra.mxu0 0.0
    %v430 = vpop.f32.mrf.mxu0
    %v431 = vadd.f32 0.0, %v430
    %v432 = vpop.f32.mrf.mxu0
    %v433 = vadd.f32 0.0, %v432
    %434 = vdwg.mxu0
    %v439 = vcombine.low %v360, %v362
    %v440 = vcombine.low %v431, %v433
    %v442 = vunpack.c.l.s4 1966171168
    %v443 = vunpack.c.0.s8 %v442
    %v444 = vlaneseq
    %v445 = vshrl.u32 %v444, 7
    %v446 = vsub.s32 %v443, %v445
    %v447 = vrot.slane %v439, %v446
    %v449 = vunpack.c.l.s4 1966171168
    %v450 = vunpack.c.0.s8 %v449
    %v451 = vlaneseq
    %v452 = vshrl.u32 %v451, 7
    %v453 = vsub.s32 %v450, %v452
    %v454 = vrot.slane %v440, %v453
    %v455 = vcombine.low %v447, %v454
    %v457 = vunpack.c.l.s4 1966171168
    %v458 = vunpack.c.0.s8 %v457
    %v459 = vlaneseq
    %v460 = vshrl.u32 %v459, 7
    %v461 = vsub.s32 %v458, %v460
    %v462 = vrot.slane %v455, %v461
    %v464 = vadd.f32 %v292, %v462
    %v465 = vxor.u32 %v464, 2147483648
    %v466 = vmul.f32 %v465, 1.442695
    %v467 = vpow.pop %v466
    %v468 = vadd.f32 %v467, 1.0
    %v469 = vrcp.pop %v468
    %v470 = vmul.f32 1.0, %v469
    %v472 = vrot.slane %v464, 1
    %v474 = vxor.u32 %v472, 2147483648
    %v475 = vmul.f32 %v474, 1.442695
    %v476 = vpow.pop %v475
    %v477 = vadd.f32 %v476, 1.0
    %v478 = vrcp.pop %v477
    %v479 = vmul.f32 1.0, %v478
    %v480 = vrot.slane %v464, 2
    %v482 = vtanh.pop %v480
    %v483 = vrot.slane %v464, 3
    %v485 = vxor.u32 %v483, 2147483648
    %v486 = vmul.f32 %v485, 1.442695
    %v487 = vpow.pop %v486
    %v488 = vadd.f32 %v487, 1.0
    %v489 = vrcp.pop %v488
    %v490 = vmul.f32 1.0, %v489
    %v491 = vmul.f32 %v479, 0.0
    %v492 = vmul.f32 %v470, %v482
    %v493 = vadd.f32 %v491, %v492
    %v494 = vtanh.pop %v493
    %v495 = vmul.f32 %v490, %v494
    %496 = vst [vmem:[%s8] sm:$0x1] %v495
    %s497 = scalar_lea.vmem [#allocation2], 1
    %v498 = vld [vmem:[%s497] ss:$8 sm:$0xf]
    %499 = vmatprep.subr.mxu0 %v289
    %500 = vmatpush1.msra.mxu0 %v288
    %501 = vmatprep.subr.mxu0 %v285
    %502 = vmatpush1.msra.mxu0 %v284
    %503 = vmatprep.subr.mxu0 %v281
    %504 = vmatpush1.msra.mxu0 %v280
    %505 = vmatprep.subr.mxu0 %v277
    %506 = vmatpush1.msra.mxu0 %v276
    %507 = vmatprep.subr.mxu0 %v273
    %508 = vmatpush1.msra.mxu0 %v272
    %509 = vmatprep.subr.mxu0 %v269
    %510 = vmatpush1.msra.mxu0 %v268
    %511 = vmatprep.subr.mxu0 %v265
    %512 = vmatpush1.msra.mxu0 %v264
    %513 = vmatprep.subr.mxu0 %v261
    %514 = vmatpush1.msra.mxu0 %v260
    %515 = vmatprep.subr.mxu0 %v257
    %516 = vmatpush1.msra.mxu0 %v256
    %517 = vmatprep.subr.mxu0 %v253
    %518 = vmatpush1.msra.mxu0 %v252
    %519 = vmatprep.subr.mxu0 %v249
    %520 = vmatpush1.msra.mxu0 %v248
    %521 = vmatprep.subr.mxu0 %v245
    %522 = vmatpush1.msra.mxu0 %v244
    %523 = vmatprep.subr.mxu0 %v241
    %524 = vmatpush1.msra.mxu0 %v240
    %525 = vmatprep.subr.mxu0 %v237
    %526 = vmatpush1.msra.mxu0 %v236
    %527 = vmatprep.subr.mxu0 %v233
    %528 = vmatpush1.msra.mxu0 %v232
    %529 = vmatprep.subr.mxu0 %v229
    %530 = vmatpush1.msra.mxu0 %v228
    %531 = vmatprep.subr.mxu0 0.0
    %532 = vmatpush2.msra.mxu0 0.0
    %533 = vmatprep.subr.mxu0 0.0
    %534 = vmatpush2.msra.mxu0 0.0
    %535 = vmatprep.subr.mxu0 0.0
    %536 = vmatpush2.msra.mxu0 0.0
    %537 = vmatprep.subr.mxu0 0.0
    %538 = vmatpush2.msra.mxu0 0.0
    %539 = vmatprep.subr.mxu0 0.0
    %540 = vmatpush2.msra.mxu0 0.0
    %541 = vmatprep.subr.mxu0 0.0
    %542 = vmatpush2.msra.mxu0 0.0
    %543 = vmatprep.subr.mxu0 0.0
    %544 = vmatpush2.msra.mxu0 0.0
    %545 = vmatprep.subr.mxu0 0.0
    %546 = vmatpush2.msra.mxu0 0.0
    %547 = vmatprep.subr.mxu0 0.0
    %548 = vmatpush2.msra.mxu0 0.0
    %549 = vmatprep.subr.mxu0 0.0
    %550 = vmatpush2.msra.mxu0 0.0
    %551 = vmatprep.subr.mxu0 0.0
    %552 = vmatpush2.msra.mxu0 0.0
    %553 = vmatprep.subr.mxu0 0.0
    %554 = vmatpush2.msra.mxu0 0.0
    %555 = vmatprep.subr.mxu0 0.0
    %556 = vmatpush2.msra.mxu0 0.0
    %557 = vmatprep.subr.mxu0 0.0
    %558 = vmatpush2.msra.mxu0 0.0
    %559 = vmatprep.subr.mxu0 0.0
    %560 = vmatpush2.msra.mxu0 0.0
    %561 = vmatprep.subr.mxu0 0.0
    %562 = vmatpush2.msra.mxu0 0.0
    %563 = vmatprep.mubr.f32.mxu0 0.0
    %564 = vmatmul.mubr.f32.gmra.mxu0 %v495
    %v565 = vpop.f32.mrf.mxu0
    %v566 = vadd.f32 0.0, %v565
    %v567 = vpop.f32.mrf.mxu0
    %v568 = vadd.f32 0.0, %v567
    %569 = vdwg.mxu0
    %570 = vmatprep.subr.mxu0 %v291
    %571 = vmatpush1.msra.mxu0 %v290
    %572 = vmatprep.subr.mxu0 %v287
    %573 = vmatpush1.msra.mxu0 %v286
    %574 = vmatprep.subr.mxu0 %v283
    %575 = vmatpush1.msra.mxu0 %v282
    %576 = vmatprep.subr.mxu0 %v279
    %577 = vmatpush1.msra.mxu0 %v278
    %578 = vmatprep.subr.mxu0 %v275
    %579 = vmatpush1.msra.mxu0 %v274
    %580 = vmatprep.subr.mxu0 %v271
    %581 = vmatpush1.msra.mxu0 %v270
    %582 = vmatprep.subr.mxu0 %v267
    %583 = vmatpush1.msra.mxu0 %v266
    %584 = vmatprep.subr.mxu0 %v263
    %585 = vmatpush1.msra.mxu0 %v262
    %586 = vmatprep.subr.mxu0 %v259
    %587 = vmatpush1.msra.mxu0 %v258
    %588 = vmatprep.subr.mxu0 %v255
    %589 = vmatpush1.msra.mxu0 %v254
    %590 = vmatprep.subr.mxu0 %v251
    %591 = vmatpush1.msra.mxu0 %v250
    %592 = vmatprep.subr.mxu0 %v247
    %593 = vmatpush1.msra.mxu0 %v246
    %594 = vmatprep.subr.mxu0 %v243
    %595 = vmatpush1.msra.mxu0 %v242
    %596 = vmatprep.subr.mxu0 %v239
    %597 = vmatpush1.msra.mxu0 %v238
    %598 = vmatprep.subr.mxu0 %v235
    %599 = vmatpush1.msra.mxu0 %v234
    %600 = vmatprep.subr.mxu0 %v231
    %601 = vmatpush1.msra.mxu0 %v230
    %602 = vmatprep.subr.mxu0 0.0
    %603 = vmatpush2.msra.mxu0 0.0
    %604 = vmatprep.subr.mxu0 0.0
    %605 = vmatpush2.msra.mxu0 0.0
    %606 = vmatprep.subr.mxu0 0.0
    %607 = vmatpush2.msra.mxu0 0.0
    %608 = vmatprep.subr.mxu0 0.0
    %609 = vmatpush2.msra.mxu0 0.0
    %610 = vmatprep.subr.mxu0 0.0
    %611 = vmatpush2.msra.mxu0 0.0
    %612 = vmatprep.subr.mxu0 0.0
    %613 = vmatpush2.msra.mxu0 0.0
    %614 = vmatprep.subr.mxu0 0.0
    %615 = vmatpush2.msra.mxu0 0.0
    %616 = vmatprep.subr.mxu0 0.0
    %617 = vmatpush2.msra.mxu0 0.0
    %618 = vmatprep.subr.mxu0 0.0
    %619 = vmatpush2.msra.mxu0 0.0
    %620 = vmatprep.subr.mxu0 0.0
    %621 = vmatpush2.msra.mxu0 0.0
    %622 = vmatprep.subr.mxu0 0.0
    %623 = vmatpush2.msra.mxu0 0.0
    %624 = vmatprep.subr.mxu0 0.0
    %625 = vmatpush2.msra.mxu0 0.0
    %626 = vmatprep.subr.mxu0 0.0
    %627 = vmatpush2.msra.mxu0 0.0
    %628 = vmatprep.subr.mxu0 0.0
    %629 = vmatpush2.msra.mxu0 0.0
    %630 = vmatprep.subr.mxu0 0.0
    %631 = vmatpush2.msra.mxu0 0.0
    %632 = vmatprep.subr.mxu0 0.0
    %633 = vmatpush2.msra.mxu0 0.0
    %634 = vmatprep.mubr.f32.mxu0 0.0
    %635 = vmatmul.mubr.f32.gmra.mxu0 %v495
    %v636 = vpop.f32.mrf.mxu0
    %v637 = vadd.f32 0.0, %v636
    %v638 = vpop.f32.mrf.mxu0
    %v639 = vadd.f32 0.0, %v638
    %640 = vdwg.mxu0
    %v645 = vcombine.low %v566, %v568
    %v646 = vcombine.low %v637, %v639
    %v648 = vunpack.c.l.s4 1966171168
    %v649 = vunpack.c.0.s8 %v648
    %v650 = vlaneseq
    %v651 = vshrl.u32 %v650, 7
    %v652 = vsub.s32 %v649, %v651
    %v653 = vrot.slane %v645, %v652
    %v655 = vunpack.c.l.s4 1966171168
    %v656 = vunpack.c.0.s8 %v655
    %v657 = vlaneseq
    %v658 = vshrl.u32 %v657, 7
    %v659 = vsub.s32 %v656, %v658
    %v660 = vrot.slane %v646, %v659
    %v661 = vcombine.low %v653, %v660
    %v663 = vunpack.c.l.s4 1966171168
    %v664 = vunpack.c.0.s8 %v663
    %v665 = vlaneseq
    %v666 = vshrl.u32 %v665, 7
    %v667 = vsub.s32 %v664, %v666
    %v668 = vrot.slane %v661, %v667
    %v670 = vadd.f32 %v498, %v668
    %v671 = vxor.u32 %v670, 2147483648
    %v672 = vmul.f32 %v671, 1.442695
    %v673 = vpow.pop %v672
    %v674 = vadd.f32 %v673, 1.0
    %v675 = vrcp.pop %v674
    %v676 = vmul.f32 1.0, %v675
    %v678 = vrot.slane %v670, 1
    %v680 = vxor.u32 %v678, 2147483648
    %v681 = vmul.f32 %v680, 1.442695
    %v682 = vpow.pop %v681
    %v683 = vadd.f32 %v682, 1.0
    %v684 = vrcp.pop %v683
    %v685 = vmul.f32 1.0, %v684
    %v686 = vrot.slane %v670, 2
    %v688 = vtanh.pop %v686
    %v689 = vrot.slane %v670, 3
    %v691 = vxor.u32 %v689, 2147483648
    %v692 = vmul.f32 %v691, 1.442695
    %v693 = vpow.pop %v692
    %v694 = vadd.f32 %v693, 1.0
    %v695 = vrcp.pop %v694
    %v696 = vmul.f32 1.0, %v695
    %v697 = vmul.f32 %v685, %v493
    %v698 = vmul.f32 %v676, %v688
    %v699 = vadd.f32 %v697, %v698
    %v700 = vtanh.pop %v699
    %v701 = vmul.f32 %v696, %v700
    %702 = vst [vmem:[%s8 + $0x1] sm:$0x1] %v701
    %s703 = scalar_lea.vmem [#allocation2], 2
    %v704 = vld [vmem:[%s703] ss:$8 sm:$0xf]
    %705 = vmatprep.subr.mxu0 %v289
    %706 = vmatpush1.msra.mxu0 %v288
    %707 = vmatprep.subr.mxu0 %v285
    %708 = vmatpush1.msra.mxu0 %v284
    %709 = vmatprep.subr.mxu0 %v281
    %710 = vmatpush1.msra.mxu0 %v280
    %711 = vmatprep.subr.mxu0 %v277
    %712 = vmatpush1.msra.mxu0 %v276
    %713 = vmatprep.subr.mxu0 %v273
    %714 = vmatpush1.msra.mxu0 %v272
    %715 = vmatprep.subr.mxu0 %v269
    %716 = vmatpush1.msra.mxu0 %v268
    %717 = vmatprep.subr.mxu0 %v265
    %718 = vmatpush1.msra.mxu0 %v264
    %719 = vmatprep.subr.mxu0 %v261
    %720 = vmatpush1.msra.mxu0 %v260
    %721 = vmatprep.subr.mxu0 %v257
    %722 = vmatpush1.msra.mxu0 %v256
    %723 = vmatprep.subr.mxu0 %v253
    %724 = vmatpush1.msra.mxu0 %v252
    %725 = vmatprep.subr.mxu0 %v249
    %726 = vmatpush1.msra.mxu0 %v248
    %727 = vmatprep.subr.mxu0 %v245
    %728 = vmatpush1.msra.mxu0 %v244
    %729 = vmatprep.subr.mxu0 %v241
    %730 = vmatpush1.msra.mxu0 %v240
    %731 = vmatprep.subr.mxu0 %v237
    %732 = vmatpush1.msra.mxu0 %v236
    %733 = vmatprep.subr.mxu0 %v233
    %734 = vmatpush1.msra.mxu0 %v232
    %735 = vmatprep.subr.mxu0 %v229
    %736 = vmatpush1.msra.mxu0 %v228
    %737 = vmatprep.subr.mxu0 0.0
    %738 = vmatpush2.msra.mxu0 0.0
    %739 = vmatprep.subr.mxu0 0.0
    %740 = vmatpush2.msra.mxu0 0.0
    %741 = vmatprep.subr.mxu0 0.0
    %742 = vmatpush2.msra.mxu0 0.0
    %743 = vmatprep.subr.mxu0 0.0
    %744 = vmatpush2.msra.mxu0 0.0
    %745 = vmatprep.subr.mxu0 0.0
    %746 = vmatpush2.msra.mxu0 0.0
    %747 = vmatprep.subr.mxu0 0.0
    %748 = vmatpush2.msra.mxu0 0.0
    %749 = vmatprep.subr.mxu0 0.0
    %750 = vmatpush2.msra.mxu0 0.0
    %751 = vmatprep.subr.mxu0 0.0
    %752 = vmatpush2.msra.mxu0 0.0
    %753 = vmatprep.subr.mxu0 0.0
    %754 = vmatpush2.msra.mxu0 0.0
    %755 = vmatprep.subr.mxu0 0.0
    %756 = vmatpush2.msra.mxu0 0.0
    %757 = vmatprep.subr.mxu0 0.0
    %758 = vmatpush2.msra.mxu0 0.0
    %759 = vmatprep.subr.mxu0 0.0
    %760 = vmatpush2.msra.mxu0 0.0
    %761 = vmatprep.subr.mxu0 0.0
    %762 = vmatpush2.msra.mxu0 0.0
    %763 = vmatprep.subr.mxu0 0.0
    %764 = vmatpush2.msra.mxu0 0.0
    %765 = vmatprep.subr.mxu0 0.0
    %766 = vmatpush2.msra.mxu0 0.0
    %767 = vmatprep.subr.mxu0 0.0
    %768 = vmatpush2.msra.mxu0 0.0
    %769 = vmatprep.mubr.f32.mxu0 0.0
    %770 = vmatmul.mubr.f32.gmra.mxu0 %v701
    %v771 = vpop.f32.mrf.mxu0
    %v772 = vadd.f32 0.0, %v771
    %v773 = vpop.f32.mrf.mxu0
    %v774 = vadd.f32 0.0, %v773
    %775 = vdwg.mxu0
    %776 = vmatprep.subr.mxu0 %v291
    %777 = vmatpush1.msra.mxu0 %v290
    %778 = vmatprep.subr.mxu0 %v287
    %779 = vmatpush1.msra.mxu0 %v286
    %780 = vmatprep.subr.mxu0 %v283
    %781 = vmatpush1.msra.mxu0 %v282
    %782 = vmatprep.subr.mxu0 %v279
    %783 = vmatpush1.msra.mxu0 %v278
    %784 = vmatprep.subr.mxu0 %v275
    %785 = vmatpush1.msra.mxu0 %v274
    %786 = vmatprep.subr.mxu0 %v271
    %787 = vmatpush1.msra.mxu0 %v270
    %788 = vmatprep.subr.mxu0 %v267
    %789 = vmatpush1.msra.mxu0 %v266
    %790 = vmatprep.subr.mxu0 %v263
    %791 = vmatpush1.msra.mxu0 %v262
    %792 = vmatprep.subr.mxu0 %v259
    %793 = vmatpush1.msra.mxu0 %v258
    %794 = vmatprep.subr.mxu0 %v255
    %795 = vmatpush1.msra.mxu0 %v254
    %796 = vmatprep.subr.mxu0 %v251
    %797 = vmatpush1.msra.mxu0 %v250
    %798 = vmatprep.subr.mxu0 %v247
    %799 = vmatpush1.msra.mxu0 %v246
    %800 = vmatprep.subr.mxu0 %v243
    %801 = vmatpush1.msra.mxu0 %v242
    %802 = vmatprep.subr.mxu0 %v239
    %803 = vmatpush1.msra.mxu0 %v238
    %804 = vmatprep.subr.mxu0 %v235
    %805 = vmatpush1.msra.mxu0 %v234
    %806 = vmatprep.subr.mxu0 %v231
    %807 = vmatpush1.msra.mxu0 %v230
    %808 = vmatprep.subr.mxu0 0.0
    %809 = vmatpush2.msra.mxu0 0.0
    %810 = vmatprep.subr.mxu0 0.0
    %811 = vmatpush2.msra.mxu0 0.0
    %812 = vmatprep.subr.mxu0 0.0
    %813 = vmatpush2.msra.mxu0 0.0
    %814 = vmatprep.subr.mxu0 0.0
    %815 = vmatpush2.msra.mxu0 0.0
    %816 = vmatprep.subr.mxu0 0.0
    %817 = vmatpush2.msra.mxu0 0.0
    %818 = vmatprep.subr.mxu0 0.0
    %819 = vmatpush2.msra.mxu0 0.0
    %820 = vmatprep.subr.mxu0 0.0
    %821 = vmatpush2.msra.mxu0 0.0
    %822 = vmatprep.subr.mxu0 0.0
    %823 = vmatpush2.msra.mxu0 0.0
    %824 = vmatprep.subr.mxu0 0.0
    %825 = vmatpush2.msra.mxu0 0.0
    %826 = vmatprep.subr.mxu0 0.0
    %827 = vmatpush2.msra.mxu0 0.0
    %828 = vmatprep.subr.mxu0 0.0
    %829 = vmatpush2.msra.mxu0 0.0
    %830 = vmatprep.subr.mxu0 0.0
    %831 = vmatpush2.msra.mxu0 0.0
    %832 = vmatprep.subr.mxu0 0.0
    %833 = vmatpush2.msra.mxu0 0.0
    %834 = vmatprep.subr.mxu0 0.0
    %835 = vmatpush2.msra.mxu0 0.0
    %836 = vmatprep.subr.mxu0 0.0
    %837 = vmatpush2.msra.mxu0 0.0
    %838 = vmatprep.subr.mxu0 0.0
    %839 = vmatpush2.msra.mxu0 0.0
    %840 = vmatprep.mubr.f32.mxu0 0.0
    %841 = vmatmul.mubr.f32.gmra.mxu0 %v701
    %v842 = vpop.f32.mrf.mxu0
    %v843 = vadd.f32 0.0, %v842
    %v844 = vpop.f32.mrf.mxu0
    %v845 = vadd.f32 0.0, %v844
    %846 = vdwg.mxu0
    %v851 = vcombine.low %v772, %v774
    %v852 = vcombine.low %v843, %v845
    %v854 = vunpack.c.l.s4 1966171168
    %v855 = vunpack.c.0.s8 %v854
    %v856 = vlaneseq
    %v857 = vshrl.u32 %v856, 7
    %v858 = vsub.s32 %v855, %v857
    %v859 = vrot.slane %v851, %v858
    %v861 = vunpack.c.l.s4 1966171168
    %v862 = vunpack.c.0.s8 %v861
    %v863 = vlaneseq
    %v864 = vshrl.u32 %v863, 7
    %v865 = vsub.s32 %v862, %v864
    %v866 = vrot.slane %v852, %v865
    %v867 = vcombine.low %v859, %v866
    %v869 = vunpack.c.l.s4 1966171168
    %v870 = vunpack.c.0.s8 %v869
    %v871 = vlaneseq
    %v872 = vshrl.u32 %v871, 7
    %v873 = vsub.s32 %v870, %v872
    %v874 = vrot.slane %v867, %v873
    %v876 = vadd.f32 %v704, %v874
    %v877 = vxor.u32 %v876, 2147483648
    %v878 = vmul.f32 %v877, 1.442695
    %v879 = vpow.pop %v878
    %v880 = vadd.f32 %v879, 1.0
    %v881 = vrcp.pop %v880
    %v882 = vmul.f32 1.0, %v881
    %v884 = vrot.slane %v876, 1
    %v886 = vxor.u32 %v884, 2147483648
    %v887 = vmul.f32 %v886, 1.442695
    %v888 = vpow.pop %v887
    %v889 = vadd.f32 %v888, 1.0
    %v890 = vrcp.pop %v889
    %v891 = vmul.f32 1.0, %v890
    %v892 = vrot.slane %v876, 2
    %v894 = vtanh.pop %v892
    %v895 = vrot.slane %v876, 3
    %v897 = vxor.u32 %v895, 2147483648
    %v898 = vmul.f32 %v897, 1.442695
    %v899 = vpow.pop %v898
    %v900 = vadd.f32 %v899, 1.0
    %v901 = vrcp.pop %v900
    %v902 = vmul.f32 1.0, %v901
    %v903 = vmul.f32 %v891, %v699
    %v904 = vmul.f32 %v882, %v894
    %v905 = vadd.f32 %v903, %v904
    %v906 = vtanh.pop %v905
    %v907 = vmul.f32 %v902, %v906
    %908 = vst [vmem:[%s8 + $0x2] sm:$0x1] %v907
    %s909 = scalar_lea.vmem [#allocation2], 3
    %v910 = vld [vmem:[%s909] ss:$8 sm:$0xf]
    %911 = vmatprep.subr.mxu0 %v289
    %912 = vmatpush1.msra.mxu0 %v288
    %913 = vmatprep.subr.mxu0 %v285
    %914 = vmatpush1.msra.mxu0 %v284
    %915 = vmatprep.subr.mxu0 %v281
    %916 = vmatpush1.msra.mxu0 %v280
    %917 = vmatprep.subr.mxu0 %v277
    %918 = vmatpush1.msra.mxu0 %v276
    %919 = vmatprep.subr.mxu0 %v273
    %920 = vmatpush1.msra.mxu0 %v272
    %921 = vmatprep.subr.mxu0 %v269
    %922 = vmatpush1.msra.mxu0 %v268
    %923 = vmatprep.subr.mxu0 %v265
    %924 = vmatpush1.msra.mxu0 %v264
    %925 = vmatprep.subr.mxu0 %v261
    %926 = vmatpush1.msra.mxu0 %v260
    %927 = vmatprep.subr.mxu0 %v257
    %928 = vmatpush1.msra.mxu0 %v256
    %929 = vmatprep.subr.mxu0 %v253
    %930 = vmatpush1.msra.mxu0 %v252
    %931 = vmatprep.subr.mxu0 %v249
    %932 = vmatpush1.msra.mxu0 %v248
    %933 = vmatprep.subr.mxu0 %v245
    %934 = vmatpush1.msra.mxu0 %v244
    %935 = vmatprep.subr.mxu0 %v241
    %936 = vmatpush1.msra.mxu0 %v240
    %937 = vmatprep.subr.mxu0 %v237
    %938 = vmatpush1.msra.mxu0 %v236
    %939 = vmatprep.subr.mxu0 %v233
    %940 = vmatpush1.msra.mxu0 %v232
    %941 = vmatprep.subr.mxu0 %v229
    %942 = vmatpush1.msra.mxu0 %v228
    %943 = vmatprep.subr.mxu0 0.0
    %944 = vmatpush2.msra.mxu0 0.0
    %945 = vmatprep.subr.mxu0 0.0
    %946 = vmatpush2.msra.mxu0 0.0
    %947 = vmatprep.subr.mxu0 0.0
    %948 = vmatpush2.msra.mxu0 0.0
    %949 = vmatprep.subr.mxu0 0.0
    %950 = vmatpush2.msra.mxu0 0.0
    %951 = vmatprep.subr.mxu0 0.0
    %952 = vmatpush2.msra.mxu0 0.0
    %953 = vmatprep.subr.mxu0 0.0
    %954 = vmatpush2.msra.mxu0 0.0
    %955 = vmatprep.subr.mxu0 0.0
    %956 = vmatpush2.msra.mxu0 0.0
    %957 = vmatprep.subr.mxu0 0.0
    %958 = vmatpush2.msra.mxu0 0.0
    %959 = vmatprep.subr.mxu0 0.0
    %960 = vmatpush2.msra.mxu0 0.0
    %961 = vmatprep.subr.mxu0 0.0
    %962 = vmatpush2.msra.mxu0 0.0
    %963 = vmatprep.subr.mxu0 0.0
    %964 = vmatpush2.msra.mxu0 0.0
    %965 = vmatprep.subr.mxu0 0.0
    %966 = vmatpush2.msra.mxu0 0.0
    %967 = vmatprep.subr.mxu0 0.0
    %968 = vmatpush2.msra.mxu0 0.0
    %969 = vmatprep.subr.mxu0 0.0
    %970 = vmatpush2.msra.mxu0 0.0
    %971 = vmatprep.subr.mxu0 0.0
    %972 = vmatpush2.msra.mxu0 0.0
    %973 = vmatprep.subr.mxu0 0.0
    %974 = vmatpush2.msra.mxu0 0.0
    %975 = vmatprep.mubr.f32.mxu0 0.0
    %976 = vmatmul.mubr.f32.gmra.mxu0 %v907
    %v977 = vpop.f32.mrf.mxu0
    %v978 = vadd.f32 0.0, %v977
    %v979 = vpop.f32.mrf.mxu0
    %v980 = vadd.f32 0.0, %v979
    %981 = vdwg.mxu0
    %982 = vmatprep.subr.mxu0 %v291
    %983 = vmatpush1.msra.mxu0 %v290
    %984 = vmatprep.subr.mxu0 %v287
    %985 = vmatpush1.msra.mxu0 %v286
    %986 = vmatprep.subr.mxu0 %v283
    %987 = vmatpush1.msra.mxu0 %v282
    %988 = vmatprep.subr.mxu0 %v279
    %989 = vmatpush1.msra.mxu0 %v278
    %990 = vmatprep.subr.mxu0 %v275
    %991 = vmatpush1.msra.mxu0 %v274
    %992 = vmatprep.subr.mxu0 %v271
    %993 = vmatpush1.msra.mxu0 %v270
    %994 = vmatprep.subr.mxu0 %v267
    %995 = vmatpush1.msra.mxu0 %v266
    %996 = vmatprep.subr.mxu0 %v263
    %997 = vmatpush1.msra.mxu0 %v262
    %998 = vmatprep.subr.mxu0 %v259
    %999 = vmatpush1.msra.mxu0 %v258
    %1000 = vmatprep.subr.mxu0 %v255
    %1001 = vmatpush1.msra.mxu0 %v254
    %1002 = vmatprep.subr.mxu0 %v251
    %1003 = vmatpush1.msra.mxu0 %v250
    %1004 = vmatprep.subr.mxu0 %v247
    %1005 = vmatpush1.msra.mxu0 %v246
    %1006 = vmatprep.subr.mxu0 %v243
    %1007 = vmatpush1.msra.mxu0 %v242
    %1008 = vmatprep.subr.mxu0 %v239
    %1009 = vmatpush1.msra.mxu0 %v238
    %1010 = vmatprep.subr.mxu0 %v235
    %1011 = vmatpush1.msra.mxu0 %v234
    %1012 = vmatprep.subr.mxu0 %v231
    %1013 = vmatpush1.msra.mxu0 %v230
    %1014 = vmatprep.subr.mxu0 0.0
    %1015 = vmatpush2.msra.mxu0 0.0
    %1016 = vmatprep.subr.mxu0 0.0
    %1017 = vmatpush2.msra.mxu0 0.0
    %1018 = vmatprep.subr.mxu0 0.0
    %1019 = vmatpush2.msra.mxu0 0.0
    %1020 = vmatprep.subr.mxu0 0.0
    %1021 = vmatpush2.msra.mxu0 0.0
    %1022 = vmatprep.subr.mxu0 0.0
    %1023 = vmatpush2.msra.mxu0 0.0
    %1024 = vmatprep.subr.mxu0 0.0
    %1025 = vmatpush2.msra.mxu0 0.0
    %1026 = vmatprep.subr.mxu0 0.0
    %1027 = vmatpush2.msra.mxu0 0.0
    %1028 = vmatprep.subr.mxu0 0.0
    %1029 = vmatpush2.msra.mxu0 0.0
    %1030 = vmatprep.subr.mxu0 0.0
    %1031 = vmatpush2.msra.mxu0 0.0
    %1032 = vmatprep.subr.mxu0 0.0
    %1033 = vmatpush2.msra.mxu0 0.0
    %1034 = vmatprep.subr.mxu0 0.0
    %1035 = vmatpush2.msra.mxu0 0.0
    %1036 = vmatprep.subr.mxu0 0.0
    %1037 = vmatpush2.msra.mxu0 0.0
    %1038 = vmatprep.subr.mxu0 0.0
    %1039 = vmatpush2.msra.mxu0 0.0
    %1040 = vmatprep.subr.mxu0 0.0
    %1041 = vmatpush2.msra.mxu0 0.0
    %1042 = vmatprep.subr.mxu0 0.0
    %1043 = vmatpush2.msra.mxu0 0.0
    %1044 = vmatprep.subr.mxu0 0.0
    %1045 = vmatpush2.msra.mxu0 0.0
    %1046 = vmatprep.mubr.f32.mxu0 0.0
    %1047 = vmatmul.mubr.f32.gmra.mxu0 %v907
    %v1048 = vpop.f32.mrf.mxu0
    %v1049 = vadd.f32 0.0, %v1048
    %v1050 = vpop.f32.mrf.mxu0
    %v1051 = vadd.f32 0.0, %v1050
    %1052 = vdwg.mxu0
    %v1057 = vcombine.low %v978, %v980
    %v1058 = vcombine.low %v1049, %v1051
    %v1060 = vunpack.c.l.s4 1966171168
    %v1061 = vunpack.c.0.s8 %v1060
    %v1062 = vlaneseq
    %v1063 = vshrl.u32 %v1062, 7
    %v1064 = vsub.s32 %v1061, %v1063
    %v1065 = vrot.slane %v1057, %v1064
    %v1067 = vunpack.c.l.s4 1966171168
    %v1068 = vunpack.c.0.s8 %v1067
    %v1069 = vlaneseq
    %v1070 = vshrl.u32 %v1069, 7
    %v1071 = vsub.s32 %v1068, %v1070
    %v1072 = vrot.slane %v1058, %v1071
    %v1073 = vcombine.low %v1065, %v1072
    %v1075 = vunpack.c.l.s4 1966171168
    %v1076 = vunpack.c.0.s8 %v1075
    %v1077 = vlaneseq
    %v1078 = vshrl.u32 %v1077, 7
    %v1079 = vsub.s32 %v1076, %v1078
    %v1080 = vrot.slane %v1073, %v1079
    %v1082 = vadd.f32 %v910, %v1080
    %v1083 = vxor.u32 %v1082, 2147483648
    %v1084 = vmul.f32 %v1083, 1.442695
    %v1085 = vpow.pop %v1084
    %v1086 = vadd.f32 %v1085, 1.0
    %v1087 = vrcp.pop %v1086
    %v1088 = vmul.f32 1.0, %v1087
    %v1090 = vrot.slane %v1082, 1
    %v1092 = vxor.u32 %v1090, 2147483648
    %v1093 = vmul.f32 %v1092, 1.442695
    %v1094 = vpow.pop %v1093
    %v1095 = vadd.f32 %v1094, 1.0
    %v1096 = vrcp.pop %v1095
    %v1097 = vmul.f32 1.0, %v1096
    %v1098 = vrot.slane %v1082, 2
    %v1100 = vtanh.pop %v1098
    %v1101 = vrot.slane %v1082, 3
    %v1103 = vxor.u32 %v1101, 2147483648
    %v1104 = vmul.f32 %v1103, 1.442695
    %v1105 = vpow.pop %v1104
    %v1106 = vadd.f32 %v1105, 1.0
    %v1107 = vrcp.pop %v1106
    %v1108 = vmul.f32 1.0, %v1107
    %v1109 = vmul.f32 %v1097, %v905
    %v1110 = vmul.f32 %v1088, %v1100
    %v1111 = vadd.f32 %v1109, %v1110
    %v1112 = vtanh.pop %v1111
    %v1113 = vmul.f32 %v1108, %v1112
    %1114 = vst [vmem:[%s8 + $0x3] sm:$0x1] %v1113
    %s1115 = scalar_lea.vmem [#allocation2], 4
    %v1116 = vld [vmem:[%s1115] ss:$8 sm:$0xf]
    %1117 = vmatprep.subr.mxu0 %v289
    %1118 = vmatpush1.msra.mxu0 %v288
    %1119 = vmatprep.subr.mxu0 %v285
    %1120 = vmatpush1.msra.mxu0 %v284
    %1121 = vmatprep.subr.mxu0 %v281
    %1122 = vmatpush1.msra.mxu0 %v280
    %1123 = vmatprep.subr.mxu0 %v277
    %1124 = vmatpush1.msra.mxu0 %v276
    %1125 = vmatprep.subr.mxu0 %v273
    %1126 = vmatpush1.msra.mxu0 %v272
    %1127 = vmatprep.subr.mxu0 %v269
    %1128 = vmatpush1.msra.mxu0 %v268
    %1129 = vmatprep.subr.mxu0 %v265
    %1130 = vmatpush1.msra.mxu0 %v264
    %1131 = vmatprep.subr.mxu0 %v261
    %1132 = vmatpush1.msra.mxu0 %v260
    %1133 = vmatprep.subr.mxu0 %v257
    %1134 = vmatpush1.msra.mxu0 %v256
    %1135 = vmatprep.subr.mxu0 %v253
    %1136 = vmatpush1.msra.mxu0 %v252
    %1137 = vmatprep.subr.mxu0 %v249
    %1138 = vmatpush1.msra.mxu0 %v248
    %1139 = vmatprep.subr.mxu0 %v245
    %1140 = vmatpush1.msra.mxu0 %v244
    %1141 = vmatprep.subr.mxu0 %v241
    %1142 = vmatpush1.msra.mxu0 %v240
    %1143 = vmatprep.subr.mxu0 %v237
    %1144 = vmatpush1.msra.mxu0 %v236
    %1145 = vmatprep.subr.mxu0 %v233
    %1146 = vmatpush1.msra.mxu0 %v232
    %1147 = vmatprep.subr.mxu0 %v229
    %1148 = vmatpush1.msra.mxu0 %v228
    %1149 = vmatprep.subr.mxu0 0.0
    %1150 = vmatpush2.msra.mxu0 0.0
    %1151 = vmatprep.subr.mxu0 0.0
    %1152 = vmatpush2.msra.mxu0 0.0
    %1153 = vmatprep.subr.mxu0 0.0
    %1154 = vmatpush2.msra.mxu0 0.0
    %1155 = vmatprep.subr.mxu0 0.0
    %1156 = vmatpush2.msra.mxu0 0.0
    %1157 = vmatprep.subr.mxu0 0.0
    %1158 = vmatpush2.msra.mxu0 0.0
    %1159 = vmatprep.subr.mxu0 0.0
    %1160 = vmatpush2.msra.mxu0 0.0
    %1161 = vmatprep.subr.mxu0 0.0
    %1162 = vmatpush2.msra.mxu0 0.0
    %1163 = vmatprep.subr.mxu0 0.0
    %1164 = vmatpush2.msra.mxu0 0.0
    %1165 = vmatprep.subr.mxu0 0.0
    %1166 = vmatpush2.msra.mxu0 0.0
    %1167 = vmatprep.subr.mxu0 0.0
    %1168 = vmatpush2.msra.mxu0 0.0
    %1169 = vmatprep.subr.mxu0 0.0
    %1170 = vmatpush2.msra.mxu0 0.0
    %1171 = vmatprep.subr.mxu0 0.0
    %1172 = vmatpush2.msra.mxu0 0.0
    %1173 = vmatprep.subr.mxu0 0.0
    %1174 = vmatpush2.msra.mxu0 0.0
    %1175 = vmatprep.subr.mxu0 0.0
    %1176 = vmatpush2.msra.mxu0 0.0
    %1177 = vmatprep.subr.mxu0 0.0
    %1178 = vmatpush2.msra.mxu0 0.0
    %1179 = vmatprep.subr.mxu0 0.0
    %1180 = vmatpush2.msra.mxu0 0.0
    %1181 = vmatprep.mubr.f32.mxu0 0.0
    %1182 = vmatmul.mubr.f32.gmra.mxu0 %v1113
    %v1183 = vpop.f32.mrf.mxu0
    %v1184 = vadd.f32 0.0, %v1183
    %v1185 = vpop.f32.mrf.mxu0
    %v1186 = vadd.f32 0.0, %v1185
    %1187 = vdwg.mxu0
    %1188 = vmatprep.subr.mxu0 %v291
    %1189 = vmatpush1.msra.mxu0 %v290
    %1190 = vmatprep.subr.mxu0 %v287
    %1191 = vmatpush1.msra.mxu0 %v286
    %1192 = vmatprep.subr.mxu0 %v283
    %1193 = vmatpush1.msra.mxu0 %v282
    %1194 = vmatprep.subr.mxu0 %v279
    %1195 = vmatpush1.msra.mxu0 %v278
    %1196 = vmatprep.subr.mxu0 %v275
    %1197 = vmatpush1.msra.mxu0 %v274
    %1198 = vmatprep.subr.mxu0 %v271
    %1199 = vmatpush1.msra.mxu0 %v270
    %1200 = vmatprep.subr.mxu0 %v267
    %1201 = vmatpush1.msra.mxu0 %v266
    %1202 = vmatprep.subr.mxu0 %v263
    %1203 = vmatpush1.msra.mxu0 %v262
    %1204 = vmatprep.subr.mxu0 %v259
    %1205 = vmatpush1.msra.mxu0 %v258
    %1206 = vmatprep.subr.mxu0 %v255
    %1207 = vmatpush1.msra.mxu0 %v254
    %1208 = vmatprep.subr.mxu0 %v251
    %1209 = vmatpush1.msra.mxu0 %v250
    %1210 = vmatprep.subr.mxu0 %v247
    %1211 = vmatpush1.msra.mxu0 %v246
    %1212 = vmatprep.subr.mxu0 %v243
    %1213 = vmatpush1.msra.mxu0 %v242
    %1214 = vmatprep.subr.mxu0 %v239
    %1215 = vmatpush1.msra.mxu0 %v238
    %1216 = vmatprep.subr.mxu0 %v235
    %1217 = vmatpush1.msra.mxu0 %v234
    %1218 = vmatprep.subr.mxu0 %v231
    %1219 = vmatpush1.msra.mxu0 %v230
    %1220 = vmatprep.subr.mxu0 0.0
    %1221 = vmatpush2.msra.mxu0 0.0
    %1222 = vmatprep.subr.mxu0 0.0
    %1223 = vmatpush2.msra.mxu0 0.0
    %1224 = vmatprep.subr.mxu0 0.0
    %1225 = vmatpush2.msra.mxu0 0.0
    %1226 = vmatprep.subr.mxu0 0.0
    %1227 = vmatpush2.msra.mxu0 0.0
    %1228 = vmatprep.subr.mxu0 0.0
    %1229 = vmatpush2.msra.mxu0 0.0
    %1230 = vmatprep.subr.mxu0 0.0
    %1231 = vmatpush2.msra.mxu0 0.0
    %1232 = vmatprep.subr.mxu0 0.0
    %1233 = vmatpush2.msra.mxu0 0.0
    %1234 = vmatprep.subr.mxu0 0.0
    %1235 = vmatpush2.msra.mxu0 0.0
    %1236 = vmatprep.subr.mxu0 0.0
    %1237 = vmatpush2.msra.mxu0 0.0
    %1238 = vmatprep.subr.mxu0 0.0
    %1239 = vmatpush2.msra.mxu0 0.0
    %1240 = vmatprep.subr.mxu0 0.0
    %1241 = vmatpush2.msra.mxu0 0.0
    %1242 = vmatprep.subr.mxu0 0.0
    %1243 = vmatpush2.msra.mxu0 0.0
    %1244 = vmatprep.subr.mxu0 0.0
    %1245 = vmatpush2.msra.mxu0 0.0
    %1246 = vmatprep.subr.mxu0 0.0
    %1247 = vmatpush2.msra.mxu0 0.0
    %1248 = vmatprep.subr.mxu0 0.0
    %1249 = vmatpush2.msra.mxu0 0.0
    %1250 = vmatprep.subr.mxu0 0.0
    %1251 = vmatpush2.msra.mxu0 0.0
    %1252 = vmatprep.mubr.f32.mxu0 0.0
    %1253 = vmatmul.mubr.f32.gmra.mxu0 %v1113
    %v1254 = vpop.f32.mrf.mxu0
    %v1255 = vadd.f32 0.0, %v1254
    %v1256 = vpop.f32.mrf.mxu0
    %v1257 = vadd.f32 0.0, %v1256
    %1258 = vdwg.mxu0
    %v1263 = vcombine.low %v1184, %v1186
    %v1264 = vcombine.low %v1255, %v1257
    %v1266 = vunpack.c.l.s4 1966171168
    %v1267 = vunpack.c.0.s8 %v1266
    %v1268 = vlaneseq
    %v1269 = vshrl.u32 %v1268, 7
    %v1270 = vsub.s32 %v1267, %v1269
    %v1271 = vrot.slane %v1263, %v1270
    %v1273 = vunpack.c.l.s4 1966171168
    %v1274 = vunpack.c.0.s8 %v1273
    %v1275 = vlaneseq
    %v1276 = vshrl.u32 %v1275, 7
    %v1277 = vsub.s32 %v1274, %v1276
    %v1278 = vrot.slane %v1264, %v1277
    %v1279 = vcombine.low %v1271, %v1278
    %v1281 = vunpack.c.l.s4 1966171168
    %v1282 = vunpack.c.0.s8 %v1281
    %v1283 = vlaneseq
    %v1284 = vshrl.u32 %v1283, 7
    %v1285 = vsub.s32 %v1282, %v1284
    %v1286 = vrot.slane %v1279, %v1285
    %v1288 = vadd.f32 %v1116, %v1286
    %v1289 = vxor.u32 %v1288, 2147483648
    %v1290 = vmul.f32 %v1289, 1.442695
    %v1291 = vpow.pop %v1290
    %v1292 = vadd.f32 %v1291, 1.0
    %v1293 = vrcp.pop %v1292
    %v1294 = vmul.f32 1.0, %v1293
    %v1296 = vrot.slane %v1288, 1
    %v1298 = vxor.u32 %v1296, 2147483648
    %v1299 = vmul.f32 %v1298, 1.442695
    %v1300 = vpow.pop %v1299
    %v1301 = vadd.f32 %v1300, 1.0
    %v1302 = vrcp.pop %v1301
    %v1303 = vmul.f32 1.0, %v1302
    %v1304 = vrot.slane %v1288, 2
    %v1306 = vtanh.pop %v1304
    %v1307 = vrot.slane %v1288, 3
    %v1309 = vxor.u32 %v1307, 2147483648
    %v1310 = vmul.f32 %v1309, 1.442695
    %v1311 = vpow.pop %v1310
    %v1312 = vadd.f32 %v1311, 1.0
    %v1313 = vrcp.pop %v1312
    %v1314 = vmul.f32 1.0, %v1313
    %v1315 = vmul.f32 %v1303, %v1111
    %v1316 = vmul.f32 %v1294, %v1306
    %v1317 = vadd.f32 %v1315, %v1316
    %v1318 = vtanh.pop %v1317
    %v1319 = vmul.f32 %v1314, %v1318
    %1320 = vst [vmem:[%s8 + $0x4] sm:$0x1] %v1319
    %s1321 = scalar_lea.vmem [#allocation2], 5
    %v1322 = vld [vmem:[%s1321] ss:$8 sm:$0xf]
    %1323 = vmatprep.subr.mxu0 %v289
    %1324 = vmatpush1.msra.mxu0 %v288
    %1325 = vmatprep.subr.mxu0 %v285
    %1326 = vmatpush1.msra.mxu0 %v284
    %1327 = vmatprep.subr.mxu0 %v281
    %1328 = vmatpush1.msra.mxu0 %v280
    %1329 = vmatprep.subr.mxu0 %v277
    %1330 = vmatpush1.msra.mxu0 %v276
    %1331 = vmatprep.subr.mxu0 %v273
    %1332 = vmatpush1.msra.mxu0 %v272
    %1333 = vmatprep.subr.mxu0 %v269
    %1334 = vmatpush1.msra.mxu0 %v268
    %1335 = vmatprep.subr.mxu0 %v265
    %1336 = vmatpush1.msra.mxu0 %v264
    %1337 = vmatprep.subr.mxu0 %v261
    %1338 = vmatpush1.msra.mxu0 %v260
    %1339 = vmatprep.subr.mxu0 %v257
    %1340 = vmatpush1.msra.mxu0 %v256
    %1341 = vmatprep.subr.mxu0 %v253
    %1342 = vmatpush1.msra.mxu0 %v252
    %1343 = vmatprep.subr.mxu0 %v249
    %1344 = vmatpush1.msra.mxu0 %v248
    %1345 = vmatprep.subr.mxu0 %v245
    %1346 = vmatpush1.msra.mxu0 %v244
    %1347 = vmatprep.subr.mxu0 %v241
    %1348 = vmatpush1.msra.mxu0 %v240
    %1349 = vmatprep.subr.mxu0 %v237
    %1350 = vmatpush1.msra.mxu0 %v236
    %1351 = vmatprep.subr.mxu0 %v233
    %1352 = vmatpush1.msra.mxu0 %v232
    %1353 = vmatprep.subr.mxu0 %v229
    %1354 = vmatpush1.msra.mxu0 %v228
    %1355 = vmatprep.subr.mxu0 0.0
    %1356 = vmatpush2.msra.mxu0 0.0
    %1357 = vmatprep.subr.mxu0 0.0
    %1358 = vmatpush2.msra.mxu0 0.0
    %1359 = vmatprep.subr.mxu0 0.0
    %1360 = vmatpush2.msra.mxu0 0.0
    %1361 = vmatprep.subr.mxu0 0.0
    %1362 = vmatpush2.msra.mxu0 0.0
    %1363 = vmatprep.subr.mxu0 0.0
    %1364 = vmatpush2.msra.mxu0 0.0
    %1365 = vmatprep.subr.mxu0 0.0
    %1366 = vmatpush2.msra.mxu0 0.0
    %1367 = vmatprep.subr.mxu0 0.0
    %1368 = vmatpush2.msra.mxu0 0.0
    %1369 = vmatprep.subr.mxu0 0.0
    %1370 = vmatpush2.msra.mxu0 0.0
    %1371 = vmatprep.subr.mxu0 0.0
    %1372 = vmatpush2.msra.mxu0 0.0
    %1373 = vmatprep.subr.mxu0 0.0
    %1374 = vmatpush2.msra.mxu0 0.0
    %1375 = vmatprep.subr.mxu0 0.0
    %1376 = vmatpush2.msra.mxu0 0.0
    %1377 = vmatprep.subr.mxu0 0.0
    %1378 = vmatpush2.msra.mxu0 0.0
    %1379 = vmatprep.subr.mxu0 0.0
    %1380 = vmatpush2.msra.mxu0 0.0
    %1381 = vmatprep.subr.mxu0 0.0
    %1382 = vmatpush2.msra.mxu0 0.0
    %1383 = vmatprep.subr.mxu0 0.0
    %1384 = vmatpush2.msra.mxu0 0.0
    %1385 = vmatprep.subr.mxu0 0.0
    %1386 = vmatpush2.msra.mxu0 0.0
    %1387 = vmatprep.mubr.f32.mxu0 0.0
    %1388 = vmatmul.mubr.f32.gmra.mxu0 %v1319
    %v1389 = vpop.f32.mrf.mxu0
    %v1390 = vadd.f32 0.0, %v1389
    %v1391 = vpop.f32.mrf.mxu0
    %v1392 = vadd.f32 0.0, %v1391
    %1393 = vdwg.mxu0
    %1394 = vmatprep.subr.mxu0 %v291
    %1395 = vmatpush1.msra.mxu0 %v290
    %1396 = vmatprep.subr.mxu0 %v287
    %1397 = vmatpush1.msra.mxu0 %v286
    %1398 = vmatprep.subr.mxu0 %v283
    %1399 = vmatpush1.msra.mxu0 %v282
    %1400 = vmatprep.subr.mxu0 %v279
    %1401 = vmatpush1.msra.mxu0 %v278
    %1402 = vmatprep.subr.mxu0 %v275
    %1403 = vmatpush1.msra.mxu0 %v274
    %1404 = vmatprep.subr.mxu0 %v271
    %1405 = vmatpush1.msra.mxu0 %v270
    %1406 = vmatprep.subr.mxu0 %v267
    %1407 = vmatpush1.msra.mxu0 %v266
    %1408 = vmatprep.subr.mxu0 %v263
    %1409 = vmatpush1.msra.mxu0 %v262
    %1410 = vmatprep.subr.mxu0 %v259
    %1411 = vmatpush1.msra.mxu0 %v258
    %1412 = vmatprep.subr.mxu0 %v255
    %1413 = vmatpush1.msra.mxu0 %v254
    %1414 = vmatprep.subr.mxu0 %v251
    %1415 = vmatpush1.msra.mxu0 %v250
    %1416 = vmatprep.subr.mxu0 %v247
    %1417 = vmatpush1.msra.mxu0 %v246
    %1418 = vmatprep.subr.mxu0 %v243
    %1419 = vmatpush1.msra.mxu0 %v242
    %1420 = vmatprep.subr.mxu0 %v239
    %1421 = vmatpush1.msra.mxu0 %v238
    %1422 = vmatprep.subr.mxu0 %v235
    %1423 = vmatpush1.msra.mxu0 %v234
    %1424 = vmatprep.subr.mxu0 %v231
    %1425 = vmatpush1.msra.mxu0 %v230
    %1426 = vmatprep.subr.mxu0 0.0
    %1427 = vmatpush2.msra.mxu0 0.0
    %1428 = vmatprep.subr.mxu0 0.0
    %1429 = vmatpush2.msra.mxu0 0.0
    %1430 = vmatprep.subr.mxu0 0.0
    %1431 = vmatpush2.msra.mxu0 0.0
    %1432 = vmatprep.subr.mxu0 0.0
    %1433 = vmatpush2.msra.mxu0 0.0
    %1434 = vmatprep.subr.mxu0 0.0
    %1435 = vmatpush2.msra.mxu0 0.0
    %1436 = vmatprep.subr.mxu0 0.0
    %1437 = vmatpush2.msra.mxu0 0.0
    %1438 = vmatprep.subr.mxu0 0.0
    %1439 = vmatpush2.msra.mxu0 0.0
    %1440 = vmatprep.subr.mxu0 0.0
    %1441 = vmatpush2.msra.mxu0 0.0
    %1442 = vmatprep.subr.mxu0 0.0
    %1443 = vmatpush2.msra.mxu0 0.0
    %1444 = vmatprep.subr.mxu0 0.0
    %1445 = vmatpush2.msra.mxu0 0.0
    %1446 = vmatprep.subr.mxu0 0.0
    %1447 = vmatpush2.msra.mxu0 0.0
    %1448 = vmatprep.subr.mxu0 0.0
    %1449 = vmatpush2.msra.mxu0 0.0
    %1450 = vmatprep.subr.mxu0 0.0
    %1451 = vmatpush2.msra.mxu0 0.0
    %1452 = vmatprep.subr.mxu0 0.0
    %1453 = vmatpush2.msra.mxu0 0.0
    %1454 = vmatprep.subr.mxu0 0.0
    %1455 = vmatpush2.msra.mxu0 0.0
    %1456 = vmatprep.subr.mxu0 0.0
    %1457 = vmatpush2.msra.mxu0 0.0
    %1458 = vmatprep.mubr.f32.mxu0 0.0
    %1459 = vmatmul.mubr.f32.gmra.mxu0 %v1319
    %v1460 = vpop.f32.mrf.mxu0
    %v1461 = vadd.f32 0.0, %v1460
    %v1462 = vpop.f32.mrf.mxu0
    %v1463 = vadd.f32 0.0, %v1462
    %1464 = vdwg.mxu0
    %v1469 = vcombine.low %v1390, %v1392
    %v1470 = vcombine.low %v1461, %v1463
    %v1472 = vunpack.c.l.s4 1966171168
    %v1473 = vunpack.c.0.s8 %v1472
    %v1474 = vlaneseq
    %v1475 = vshrl.u32 %v1474, 7
    %v1476 = vsub.s32 %v1473, %v1475
    %v1477 = vrot.slane %v1469, %v1476
    %v1479 = vunpack.c.l.s4 1966171168
    %v1480 = vunpack.c.0.s8 %v1479
    %v1481 = vlaneseq
    %v1482 = vshrl.u32 %v1481, 7
    %v1483 = vsub.s32 %v1480, %v1482
    %v1484 = vrot.slane %v1470, %v1483
    %v1485 = vcombine.low %v1477, %v1484
    %v1487 = vunpack.c.l.s4 1966171168
    %v1488 = vunpack.c.0.s8 %v1487
    %v1489 = vlaneseq
    %v1490 = vshrl.u32 %v1489, 7
    %v1491 = vsub.s32 %v1488, %v1490
    %v1492 = vrot.slane %v1485, %v1491
    %v1494 = vadd.f32 %v1322, %v1492
    %v1495 = vxor.u32 %v1494, 2147483648
    %v1496 = vmul.f32 %v1495, 1.442695
    %v1497 = vpow.pop %v1496
    %v1498 = vadd.f32 %v1497, 1.0
    %v1499 = vrcp.pop %v1498
    %v1500 = vmul.f32 1.0, %v1499
    %v1502 = vrot.slane %v1494, 1
    %v1504 = vxor.u32 %v1502, 2147483648
    %v1505 = vmul.f32 %v1504, 1.442695
    %v1506 = vpow.pop %v1505
    %v1507 = vadd.f32 %v1506, 1.0
    %v1508 = vrcp.pop %v1507
    %v1509 = vmul.f32 1.0, %v1508
    %v1510 = vrot.slane %v1494, 2
    %v1512 = vtanh.pop %v1510
    %v1513 = vrot.slane %v1494, 3
    %v1515 = vxor.u32 %v1513, 2147483648
    %v1516 = vmul.f32 %v1515, 1.442695
    %v1517 = vpow.pop %v1516
    %v1518 = vadd.f32 %v1517, 1.0
    %v1519 = vrcp.pop %v1518
    %v1520 = vmul.f32 1.0, %v1519
    %v1521 = vmul.f32 %v1509, %v1317
    %v1522 = vmul.f32 %v1500, %v1512
    %v1523 = vadd.f32 %v1521, %v1522
    %v1524 = vtanh.pop %v1523
    %v1525 = vmul.f32 %v1520, %v1524
    %1526 = vst [vmem:[%s8 + $0x5] sm:$0x1] %v1525
    %s1527 = scalar_lea.vmem [#allocation2], 6
    %v1528 = vld [vmem:[%s1527] ss:$8 sm:$0xf]
    %1529 = vmatprep.subr.mxu0 %v289
    %1530 = vmatpush1.msra.mxu0 %v288
    %1531 = vmatprep.subr.mxu0 %v285
    %1532 = vmatpush1.msra.mxu0 %v284
    %1533 = vmatprep.subr.mxu0 %v281
    %1534 = vmatpush1.msra.mxu0 %v280
    %1535 = vmatprep.subr.mxu0 %v277
    %1536 = vmatpush1.msra.mxu0 %v276
    %1537 = vmatprep.subr.mxu0 %v273
    %1538 = vmatpush1.msra.mxu0 %v272
    %1539 = vmatprep.subr.mxu0 %v269
    %1540 = vmatpush1.msra.mxu0 %v268
    %1541 = vmatprep.subr.mxu0 %v265
    %1542 = vmatpush1.msra.mxu0 %v264
    %1543 = vmatprep.subr.mxu0 %v261
    %1544 = vmatpush1.msra.mxu0 %v260
    %1545 = vmatprep.subr.mxu0 %v257
    %1546 = vmatpush1.msra.mxu0 %v256
    %1547 = vmatprep.subr.mxu0 %v253
    %1548 = vmatpush1.msra.mxu0 %v252
    %1549 = vmatprep.subr.mxu0 %v249
    %1550 = vmatpush1.msra.mxu0 %v248
    %1551 = vmatprep.subr.mxu0 %v245
    %1552 = vmatpush1.msra.mxu0 %v244
    %1553 = vmatprep.subr.mxu0 %v241
    %1554 = vmatpush1.msra.mxu0 %v240
    %1555 = vmatprep.subr.mxu0 %v237
    %1556 = vmatpush1.msra.mxu0 %v236
    %1557 = vmatprep.subr.mxu0 %v233
    %1558 = vmatpush1.msra.mxu0 %v232
    %1559 = vmatprep.subr.mxu0 %v229
    %1560 = vmatpush1.msra.mxu0 %v228
    %1561 = vmatprep.subr.mxu0 0.0
    %1562 = vmatpush2.msra.mxu0 0.0
    %1563 = vmatprep.subr.mxu0 0.0
    %1564 = vmatpush2.msra.mxu0 0.0
    %1565 = vmatprep.subr.mxu0 0.0
    %1566 = vmatpush2.msra.mxu0 0.0
    %1567 = vmatprep.subr.mxu0 0.0
    %1568 = vmatpush2.msra.mxu0 0.0
    %1569 = vmatprep.subr.mxu0 0.0
    %1570 = vmatpush2.msra.mxu0 0.0
    %1571 = vmatprep.subr.mxu0 0.0
    %1572 = vmatpush2.msra.mxu0 0.0
    %1573 = vmatprep.subr.mxu0 0.0
    %1574 = vmatpush2.msra.mxu0 0.0
    %1575 = vmatprep.subr.mxu0 0.0
    %1576 = vmatpush2.msra.mxu0 0.0
    %1577 = vmatprep.subr.mxu0 0.0
    %1578 = vmatpush2.msra.mxu0 0.0
    %1579 = vmatprep.subr.mxu0 0.0
    %1580 = vmatpush2.msra.mxu0 0.0
    %1581 = vmatprep.subr.mxu0 0.0
    %1582 = vmatpush2.msra.mxu0 0.0
    %1583 = vmatprep.subr.mxu0 0.0
    %1584 = vmatpush2.msra.mxu0 0.0
    %1585 = vmatprep.subr.mxu0 0.0
    %1586 = vmatpush2.msra.mxu0 0.0
    %1587 = vmatprep.subr.mxu0 0.0
    %1588 = vmatpush2.msra.mxu0 0.0
    %1589 = vmatprep.subr.mxu0 0.0
    %1590 = vmatpush2.msra.mxu0 0.0
    %1591 = vmatprep.subr.mxu0 0.0
    %1592 = vmatpush2.msra.mxu0 0.0
    %1593 = vmatprep.mubr.f32.mxu0 0.0
    %1594 = vmatmul.mubr.f32.gmra.mxu0 %v1525
    %v1595 = vpop.f32.mrf.mxu0
    %v1596 = vadd.f32 0.0, %v1595
    %v1597 = vpop.f32.mrf.mxu0
    %v1598 = vadd.f32 0.0, %v1597
    %1599 = vdwg.mxu0
    %1600 = vmatprep.subr.mxu0 %v291
    %1601 = vmatpush1.msra.mxu0 %v290
    %1602 = vmatprep.subr.mxu0 %v287
    %1603 = vmatpush1.msra.mxu0 %v286
    %1604 = vmatprep.subr.mxu0 %v283
    %1605 = vmatpush1.msra.mxu0 %v282
    %1606 = vmatprep.subr.mxu0 %v279
    %1607 = vmatpush1.msra.mxu0 %v278
    %1608 = vmatprep.subr.mxu0 %v275
    %1609 = vmatpush1.msra.mxu0 %v274
    %1610 = vmatprep.subr.mxu0 %v271
    %1611 = vmatpush1.msra.mxu0 %v270
    %1612 = vmatprep.subr.mxu0 %v267
    %1613 = vmatpush1.msra.mxu0 %v266
    %1614 = vmatprep.subr.mxu0 %v263
    %1615 = vmatpush1.msra.mxu0 %v262
    %1616 = vmatprep.subr.mxu0 %v259
    %1617 = vmatpush1.msra.mxu0 %v258
    %1618 = vmatprep.subr.mxu0 %v255
    %1619 = vmatpush1.msra.mxu0 %v254
    %1620 = vmatprep.subr.mxu0 %v251
    %1621 = vmatpush1.msra.mxu0 %v250
    %1622 = vmatprep.subr.mxu0 %v247
    %1623 = vmatpush1.msra.mxu0 %v246
    %1624 = vmatprep.subr.mxu0 %v243
    %1625 = vmatpush1.msra.mxu0 %v242
    %1626 = vmatprep.subr.mxu0 %v239
    %1627 = vmatpush1.msra.mxu0 %v238
    %1628 = vmatprep.subr.mxu0 %v235
    %1629 = vmatpush1.msra.mxu0 %v234
    %1630 = vmatprep.subr.mxu0 %v231
    %1631 = vmatpush1.msra.mxu0 %v230
    %1632 = vmatprep.subr.mxu0 0.0
    %1633 = vmatpush2.msra.mxu0 0.0
    %1634 = vmatprep.subr.mxu0 0.0
    %1635 = vmatpush2.msra.mxu0 0.0
    %1636 = vmatprep.subr.mxu0 0.0
    %1637 = vmatpush2.msra.mxu0 0.0
    %1638 = vmatprep.subr.mxu0 0.0
    %1639 = vmatpush2.msra.mxu0 0.0
    %1640 = vmatprep.subr.mxu0 0.0
    %1641 = vmatpush2.msra.mxu0 0.0
    %1642 = vmatprep.subr.mxu0 0.0
    %1643 = vmatpush2.msra.mxu0 0.0
    %1644 = vmatprep.subr.mxu0 0.0
    %1645 = vmatpush2.msra.mxu0 0.0
    %1646 = vmatprep.subr.mxu0 0.0
    %1647 = vmatpush2.msra.mxu0 0.0
    %1648 = vmatprep.subr.mxu0 0.0
    %1649 = vmatpush2.msra.mxu0 0.0
    %1650 = vmatprep.subr.mxu0 0.0
    %1651 = vmatpush2.msra.mxu0 0.0
    %1652 = vmatprep.subr.mxu0 0.0
    %1653 = vmatpush2.msra.mxu0 0.0
    %1654 = vmatprep.subr.mxu0 0.0
    %1655 = vmatpush2.msra.mxu0 0.0
    %1656 = vmatprep.subr.mxu0 0.0
    %1657 = vmatpush2.msra.mxu0 0.0
    %1658 = vmatprep.subr.mxu0 0.0
    %1659 = vmatpush2.msra.mxu0 0.0
    %1660 = vmatprep.subr.mxu0 0.0
    %1661 = vmatpush2.msra.mxu0 0.0
    %1662 = vmatprep.subr.mxu0 0.0
    %1663 = vmatpush2.msra.mxu0 0.0
    %1664 = vmatprep.mubr.f32.mxu0 0.0
    %1665 = vmatmul.mubr.f32.gmra.mxu0 %v1525
    %v1666 = vpop.f32.mrf.mxu0
    %v1667 = vadd.f32 0.0, %v1666
    %v1668 = vpop.f32.mrf.mxu0
    %v1669 = vadd.f32 0.0, %v1668
    %1670 = vdwg.mxu0
    %v1675 = vcombine.low %v1596, %v1598
    %v1676 = vcombine.low %v1667, %v1669
    %v1678 = vunpack.c.l.s4 1966171168
    %v1679 = vunpack.c.0.s8 %v1678
    %v1680 = vlaneseq
    %v1681 = vshrl.u32 %v1680, 7
    %v1682 = vsub.s32 %v1679, %v1681
    %v1683 = vrot.slane %v1675, %v1682
    %v1685 = vunpack.c.l.s4 1966171168
    %v1686 = vunpack.c.0.s8 %v1685
    %v1687 = vlaneseq
    %v1688 = vshrl.u32 %v1687, 7
    %v1689 = vsub.s32 %v1686, %v1688
    %v1690 = vrot.slane %v1676, %v1689
    %v1691 = vcombine.low %v1683, %v1690
    %v1693 = vunpack.c.l.s4 1966171168
    %v1694 = vunpack.c.0.s8 %v1693
    %v1695 = vlaneseq
    %v1696 = vshrl.u32 %v1695, 7
    %v1697 = vsub.s32 %v1694, %v1696
    %v1698 = vrot.slane %v1691, %v1697
    %v1700 = vadd.f32 %v1528, %v1698
    %v1701 = vxor.u32 %v1700, 2147483648
    %v1702 = vmul.f32 %v1701, 1.442695
    %v1703 = vpow.pop %v1702
    %v1704 = vadd.f32 %v1703, 1.0
    %v1705 = vrcp.pop %v1704
    %v1706 = vmul.f32 1.0, %v1705
    %v1708 = vrot.slane %v1700, 1
    %v1710 = vxor.u32 %v1708, 2147483648
    %v1711 = vmul.f32 %v1710, 1.442695
    %v1712 = vpow.pop %v1711
    %v1713 = vadd.f32 %v1712, 1.0
    %v1714 = vrcp.pop %v1713
    %v1715 = vmul.f32 1.0, %v1714
    %v1716 = vrot.slane %v1700, 2
    %v1718 = vtanh.pop %v1716
    %v1719 = vrot.slane %v1700, 3
    %v1721 = vxor.u32 %v1719, 2147483648
    %v1722 = vmul.f32 %v1721, 1.442695
    %v1723 = vpow.pop %v1722
    %v1724 = vadd.f32 %v1723, 1.0
    %v1725 = vrcp.pop %v1724
    %v1726 = vmul.f32 1.0, %v1725
    %v1727 = vmul.f32 %v1715, %v1523
    %v1728 = vmul.f32 %v1706, %v1718
    %v1729 = vadd.f32 %v1727, %v1728
    %v1730 = vtanh.pop %v1729
    %v1731 = vmul.f32 %v1726, %v1730
    %1732 = vst [vmem:[%s8 + $0x6] sm:$0x1] %v1731
    %s1733 = scalar_lea.vmem [#allocation2], 7
    %v1734 = vld [vmem:[%s1733] ss:$8 sm:$0xf]
    %1735 = vmatprep.subr.mxu0 %v289
    %1736 = vmatpush1.msra.mxu0 %v288
    %1737 = vmatprep.subr.mxu0 %v285
    %1738 = vmatpush1.msra.mxu0 %v284
    %1739 = vmatprep.subr.mxu0 %v281
    %1740 = vmatpush1.msra.mxu0 %v280
    %1741 = vmatprep.subr.mxu0 %v277
    %1742 = vmatpush1.msra.mxu0 %v276
    %1743 = vmatprep.subr.mxu0 %v273
    %1744 = vmatpush1.msra.mxu0 %v272
    %1745 = vmatprep.subr.mxu0 %v269
    %1746 = vmatpush1.msra.mxu0 %v268
    %1747 = vmatprep.subr.mxu0 %v265
    %1748 = vmatpush1.msra.mxu0 %v264
    %1749 = vmatprep.subr.mxu0 %v261
    %1750 = vmatpush1.msra.mxu0 %v260
    %1751 = vmatprep.subr.mxu0 %v257
    %1752 = vmatpush1.msra.mxu0 %v256
    %1753 = vmatprep.subr.mxu0 %v253
    %1754 = vmatpush1.msra.mxu0 %v252
    %1755 = vmatprep.subr.mxu0 %v249
    %1756 = vmatpush1.msra.mxu0 %v248
    %1757 = vmatprep.subr.mxu0 %v245
    %1758 = vmatpush1.msra.mxu0 %v244
    %1759 = vmatprep.subr.mxu0 %v241
    %1760 = vmatpush1.msra.mxu0 %v240
    %1761 = vmatprep.subr.mxu0 %v237
    %1762 = vmatpush1.msra.mxu0 %v236
    %1763 = vmatprep.subr.mxu0 %v233
    %1764 = vmatpush1.msra.mxu0 %v232
    %1765 = vmatprep.subr.mxu0 %v229
    %1766 = vmatpush1.msra.mxu0 %v228
    %1767 = vmatprep.subr.mxu0 0.0
    %1768 = vmatpush2.msra.mxu0 0.0
    %1769 = vmatprep.subr.mxu0 0.0
    %1770 = vmatpush2.msra.mxu0 0.0
    %1771 = vmatprep.subr.mxu0 0.0
    %1772 = vmatpush2.msra.mxu0 0.0
    %1773 = vmatprep.subr.mxu0 0.0
    %1774 = vmatpush2.msra.mxu0 0.0
    %1775 = vmatprep.subr.mxu0 0.0
    %1776 = vmatpush2.msra.mxu0 0.0
    %1777 = vmatprep.subr.mxu0 0.0
    %1778 = vmatpush2.msra.mxu0 0.0
    %1779 = vmatprep.subr.mxu0 0.0
    %1780 = vmatpush2.msra.mxu0 0.0
    %1781 = vmatprep.subr.mxu0 0.0
    %1782 = vmatpush2.msra.mxu0 0.0
    %1783 = vmatprep.subr.mxu0 0.0
    %1784 = vmatpush2.msra.mxu0 0.0
    %1785 = vmatprep.subr.mxu0 0.0
    %1786 = vmatpush2.msra.mxu0 0.0
    %1787 = vmatprep.subr.mxu0 0.0
    %1788 = vmatpush2.msra.mxu0 0.0
    %1789 = vmatprep.subr.mxu0 0.0
    %1790 = vmatpush2.msra.mxu0 0.0
    %1791 = vmatprep.subr.mxu0 0.0
    %1792 = vmatpush2.msra.mxu0 0.0
    %1793 = vmatprep.subr.mxu0 0.0
    %1794 = vmatpush2.msra.mxu0 0.0
    %1795 = vmatprep.subr.mxu0 0.0
    %1796 = vmatpush2.msra.mxu0 0.0
    %1797 = vmatprep.subr.mxu0 0.0
    %1798 = vmatpush2.msra.mxu0 0.0
    %1799 = vmatprep.mubr.f32.mxu0 0.0
    %1800 = vmatmul.mubr.f32.gmra.mxu0 %v1731
    %v1801 = vpop.f32.mrf.mxu0
    %v1802 = vadd.f32 0.0, %v1801
    %v1803 = vpop.f32.mrf.mxu0
    %v1804 = vadd.f32 0.0, %v1803
    %1805 = vdwg.mxu0
    %1806 = vmatprep.subr.mxu0 %v291
    %1807 = vmatpush1.msra.mxu0 %v290
    %1808 = vmatprep.subr.mxu0 %v287
    %1809 = vmatpush1.msra.mxu0 %v286
    %1810 = vmatprep.subr.mxu0 %v283
    %1811 = vmatpush1.msra.mxu0 %v282
    %1812 = vmatprep.subr.mxu0 %v279
    %1813 = vmatpush1.msra.mxu0 %v278
    %1814 = vmatprep.subr.mxu0 %v275
    %1815 = vmatpush1.msra.mxu0 %v274
    %1816 = vmatprep.subr.mxu0 %v271
    %1817 = vmatpush1.msra.mxu0 %v270
    %1818 = vmatprep.subr.mxu0 %v267
    %1819 = vmatpush1.msra.mxu0 %v266
    %1820 = vmatprep.subr.mxu0 %v263
    %1821 = vmatpush1.msra.mxu0 %v262
    %1822 = vmatprep.subr.mxu0 %v259
    %1823 = vmatpush1.msra.mxu0 %v258
    %1824 = vmatprep.subr.mxu0 %v255
    %1825 = vmatpush1.msra.mxu0 %v254
    %1826 = vmatprep.subr.mxu0 %v251
    %1827 = vmatpush1.msra.mxu0 %v250
    %1828 = vmatprep.subr.mxu0 %v247
    %1829 = vmatpush1.msra.mxu0 %v246
    %1830 = vmatprep.subr.mxu0 %v243
    %1831 = vmatpush1.msra.mxu0 %v242
    %1832 = vmatprep.subr.mxu0 %v239
    %1833 = vmatpush1.msra.mxu0 %v238
    %1834 = vmatprep.subr.mxu0 %v235
    %1835 = vmatpush1.msra.mxu0 %v234
    %1836 = vmatprep.subr.mxu0 %v231
    %1837 = vmatpush1.msra.mxu0 %v230
    %1838 = vmatprep.subr.mxu0 0.0
    %1839 = vmatpush2.msra.mxu0 0.0
    %1840 = vmatprep.subr.mxu0 0.0
    %1841 = vmatpush2.msra.mxu0 0.0
    %1842 = vmatprep.subr.mxu0 0.0
    %1843 = vmatpush2.msra.mxu0 0.0
    %1844 = vmatprep.subr.mxu0 0.0
    %1845 = vmatpush2.msra.mxu0 0.0
    %1846 = vmatprep.subr.mxu0 0.0
    %1847 = vmatpush2.msra.mxu0 0.0
    %1848 = vmatprep.subr.mxu0 0.0
    %1849 = vmatpush2.msra.mxu0 0.0
    %1850 = vmatprep.subr.mxu0 0.0
    %1851 = vmatpush2.msra.mxu0 0.0
    %1852 = vmatprep.subr.mxu0 0.0
    %1853 = vmatpush2.msra.mxu0 0.0
    %1854 = vmatprep.subr.mxu0 0.0
    %1855 = vmatpush2.msra.mxu0 0.0
    %1856 = vmatprep.subr.mxu0 0.0
    %1857 = vmatpush2.msra.mxu0 0.0
    %1858 = vmatprep.subr.mxu0 0.0
    %1859 = vmatpush2.msra.mxu0 0.0
    %1860 = vmatprep.subr.mxu0 0.0
    %1861 = vmatpush2.msra.mxu0 0.0
    %1862 = vmatprep.subr.mxu0 0.0
    %1863 = vmatpush2.msra.mxu0 0.0
    %1864 = vmatprep.subr.mxu0 0.0
    %1865 = vmatpush2.msra.mxu0 0.0
    %1866 = vmatprep.subr.mxu0 0.0
    %1867 = vmatpush2.msra.mxu0 0.0
    %1868 = vmatprep.subr.mxu0 0.0
    %1869 = vmatpush2.msra.mxu0 0.0
    %1870 = vmatprep.mubr.f32.mxu0 0.0
    %1871 = vmatmul.mubr.f32.gmra.mxu0 %v1731
    %v1872 = vpop.f32.mrf.mxu0
    %v1873 = vadd.f32 0.0, %v1872
    %v1874 = vpop.f32.mrf.mxu0
    %v1875 = vadd.f32 0.0, %v1874
    %1876 = vdwg.mxu0
    %v1881 = vcombine.low %v1802, %v1804
    %v1882 = vcombine.low %v1873, %v1875
    %v1884 = vunpack.c.l.s4 1966171168
    %v1885 = vunpack.c.0.s8 %v1884
    %v1886 = vlaneseq
    %v1887 = vshrl.u32 %v1886, 7
    %v1888 = vsub.s32 %v1885, %v1887
    %v1889 = vrot.slane %v1881, %v1888
    %v1891 = vunpack.c.l.s4 1966171168
    %v1892 = vunpack.c.0.s8 %v1891
    %v1893 = vlaneseq
    %v1894 = vshrl.u32 %v1893, 7
    %v1895 = vsub.s32 %v1892, %v1894
    %v1896 = vrot.slane %v1882, %v1895
    %v1897 = vcombine.low %v1889, %v1896
    %v1899 = vunpack.c.l.s4 1966171168
    %v1900 = vunpack.c.0.s8 %v1899
    %v1901 = vlaneseq
    %v1902 = vshrl.u32 %v1901, 7
    %v1903 = vsub.s32 %v1900, %v1902
    %v1904 = vrot.slane %v1897, %v1903
    %v1906 = vadd.f32 %v1734, %v1904
    %v1907 = vxor.u32 %v1906, 2147483648
    %v1908 = vmul.f32 %v1907, 1.442695
    %v1909 = vpow.pop %v1908
    %v1910 = vadd.f32 %v1909, 1.0
    %v1911 = vrcp.pop %v1910
    %v1912 = vmul.f32 1.0, %v1911
    %v1914 = vrot.slane %v1906, 1
    %v1916 = vxor.u32 %v1914, 2147483648
    %v1917 = vmul.f32 %v1916, 1.442695
    %v1918 = vpow.pop %v1917
    %v1919 = vadd.f32 %v1918, 1.0
    %v1920 = vrcp.pop %v1919
    %v1921 = vmul.f32 1.0, %v1920
    %v1922 = vrot.slane %v1906, 2
    %v1924 = vtanh.pop %v1922
    %v1925 = vrot.slane %v1906, 3
    %v1927 = vxor.u32 %v1925, 2147483648
    %v1928 = vmul.f32 %v1927, 1.442695
    %v1929 = vpow.pop %v1928
    %v1930 = vadd.f32 %v1929, 1.0
    %v1931 = vrcp.pop %v1930
    %v1932 = vmul.f32 1.0, %v1931
    %v1933 = vmul.f32 %v1921, %v1729
    %v1934 = vmul.f32 %v1912, %v1924
    %v1935 = vadd.f32 %v1933, %v1934
    %v1936 = vtanh.pop %v1935
    %v1937 = vmul.f32 %v1932, %v1936
    %1938 = vst [vmem:[%s8 + $0x7] sm:$0x1] %v1937
    %1939 = vst [vmem:[%s10] sm:$0x1] %v1935
    %v1940 = vld [vmem:[%s8] sm:$0xff]
    %v1941 = vld [vmem:[%s4] sm:$0xff]
    %v1942 = vld [vmem:[%s4 + $0x8] sm:$0xff]
    %v1943 = vld [vmem:[%s4 + $0x10] sm:$0xff]
    %v1944 = vld [vmem:[%s4 + $0x18] sm:$0xff]
    %v1945 = vld [vmem:[%s4 + $0x20] sm:$0xff]
    %v1946 = vld [vmem:[%s4 + $0x28] sm:$0xff]
    %v1947 = vld [vmem:[%s4 + $0x30] sm:$0xff]
    %v1948 = vld [vmem:[%s4 + $0x38] sm:$0xff]
    %v1949 = vld [vmem:[%s4 + $0x40] sm:$0xff]
    %v1950 = vld [vmem:[%s4 + $0x48] sm:$0xff]
    %v1951 = vld [vmem:[%s4 + $0x50] sm:$0xff]
    %v1952 = vld [vmem:[%s4 + $0x58] sm:$0xff]
    %v1953 = vld [vmem:[%s4 + $0x60] sm:$0xff]
    %v1954 = vld [vmem:[%s4 + $0x68] sm:$0xff]
    %v1955 = vld [vmem:[%s4 + $0x70] sm:$0xff]
    %v1956 = vld [vmem:[%s4 + $0x78] sm:$0xff]
    %v1957 = vld [vmem:[%s5] sm:$0x1]
    %v1959 = vlaneseq
    %v1960 = vshrl.u32 %v1959, 7
    %v1961 = vsub.s32 0, %v1960
    %v1962 = vrot.slane %v1957, %v1961
    %1964 = vmatprep.subr.mxu0 0.0
    %1965 = vmatpush1.msra.mxu0 %v1956
    %1966 = vmatprep.subr.mxu0 0.0
    %1967 = vmatpush1.msra.mxu0 %v1955
    %1968 = vmatprep.subr.mxu0 0.0
    %1969 = vmatpush1.msra.mxu0 %v1954
    %1970 = vmatprep.subr.mxu0 0.0
    %1971 = vmatpush1.msra.mxu0 %v1953
    %1972 = vmatprep.subr.mxu0 0.0
    %1973 = vmatpush1.msra.mxu0 %v1952
    %1974 = vmatprep.subr.mxu0 0.0
    %1975 = vmatpush1.msra.mxu0 %v1951
    %1976 = vmatprep.subr.mxu0 0.0
    %1977 = vmatpush1.msra.mxu0 %v1950
    %1978 = vmatprep.subr.mxu0 0.0
    %1979 = vmatpush1.msra.mxu0 %v1949
    %1980 = vmatprep.subr.mxu0 0.0
    %1981 = vmatpush1.msra.mxu0 %v1948
    %1982 = vmatprep.subr.mxu0 0.0
    %1983 = vmatpush1.msra.mxu0 %v1947
    %1984 = vmatprep.subr.mxu0 0.0
    %1985 = vmatpush1.msra.mxu0 %v1946
    %1986 = vmatprep.subr.mxu0 0.0
    %1987 = vmatpush1.msra.mxu0 %v1945
    %1988 = vmatprep.subr.mxu0 0.0
    %1989 = vmatpush1.msra.mxu0 %v1944
    %1990 = vmatprep.subr.mxu0 0.0
    %1991 = vmatpush1.msra.mxu0 %v1943
    %1992 = vmatprep.subr.mxu0 0.0
    %1993 = vmatpush1.msra.mxu0 %v1942
    %1994 = vmatprep.subr.mxu0 0.0
    %1995 = vmatpush1.msra.mxu0 %v1941
    %1996 = vmatprep.subr.mxu0 0.0
    %1997 = vmatpush2.msra.mxu0 0.0
    %1998 = vmatprep.subr.mxu0 0.0
    %1999 = vmatpush2.msra.mxu0 0.0
    %2000 = vmatprep.subr.mxu0 0.0
    %2001 = vmatpush2.msra.mxu0 0.0
    %2002 = vmatprep.subr.mxu0 0.0
    %2003 = vmatpush2.msra.mxu0 0.0
    %2004 = vmatprep.subr.mxu0 0.0
    %2005 = vmatpush2.msra.mxu0 0.0
    %2006 = vmatprep.subr.mxu0 0.0
    %2007 = vmatpush2.msra.mxu0 0.0
    %2008 = vmatprep.subr.mxu0 0.0
    %2009 = vmatpush2.msra.mxu0 0.0
    %2010 = vmatprep.subr.mxu0 0.0
    %2011 = vmatpush2.msra.mxu0 0.0
    %2012 = vmatprep.subr.mxu0 0.0
    %2013 = vmatpush2.msra.mxu0 0.0
    %2014 = vmatprep.subr.mxu0 0.0
    %2015 = vmatpush2.msra.mxu0 0.0
    %2016 = vmatprep.subr.mxu0 0.0
    %2017 = vmatpush2.msra.mxu0 0.0
    %2018 = vmatprep.subr.mxu0 0.0
    %2019 = vmatpush2.msra.mxu0 0.0
    %2020 = vmatprep.subr.mxu0 0.0
    %2021 = vmatpush2.msra.mxu0 0.0
    %2022 = vmatprep.subr.mxu0 0.0
    %2023 = vmatpush2.msra.mxu0 0.0
    %2024 = vmatprep.subr.mxu0 0.0
    %2025 = vmatpush2.msra.mxu0 0.0
    %2026 = vmatprep.subr.mxu0 0.0
    %2027 = vmatpush2.msra.mxu0 0.0
    %2028 = vmatprep.mubr.f32.mxu0 0.0
    %2029 = vmatmul.mubr.f32.gmra.mxu0 %v1940
    %v2030 = vpop.f32.mrf.mxu0
    %v2031 = vadd.f32 %v1962, %v2030
    %v2032 = vpop.f32.mrf.mxu0
    %2033 = vdwg.mxu0
    %2034 = vst [vmem:[#allocation4] sm:$0xff] %v2031
    %v2035 = vld [vmem:[%s8] sm:$0xff]
    %v2036 = vlaneseq
    %v2037 = vand.u32 %v2036, 127
    %vm2038 = vcmp.lt.s32.totalorder %v2037, 32
    %v2039 = vsel %vm2038, %v2035, -inf
    %2040 = vmax.xlane.f32.xlu0 %v2039
    %v2041 = vpop.xlane.xlu0 %2040
    %vm2042 = vcmask 7168
    %2043 = vst.msk [vmem:[%s11] sm:$0xff] %vm2042, %v2041
    %vm2044 = vcmp.eq.f32.partialorder %v2039, %v2041
    %v2045 = vsel %vm2044, %v2037, 128
    %v2046 = vand.u32 %v2045, 65535
    %v2047 = vshra.s32 %v2045, 16
    %v2048 = vcvt.s32.f32 %v2046
    %v2049 = vcvt.s32.f32 %v2047
    %2050 = vmin.xlane.f32.xlu0 %v2049
    %v2051 = vpop.xlane.xlu0 %2050
    %vm2052 = vcmp.eq.f32.partialorder %v2049, %v2051
    %v2053 = vsel %vm2052, %v2048, inf
    %2054 = vmin.xlane.f32.xlu0 %v2053
    %v2055 = vpop.xlane.xlu0 %2054
    %v2056 = vcvt.f32.s32 %v2055
    %v2057 = vcvt.f32.s32 %v2051
    %v2058 = vshll.u32 %v2057, 16
    %v2059 = vadd.s32 %v2058, %v2056
    %2060 = vst.msk [vmem:[%s12] sm:$0xff] %vm2042, %v2059
    %v2061 = vld [vmem:[%s6] sm:$0x1]
    %v2062 = vmul.f32 %v1937, %v2061
    %vm2063 = vcmask 1040384
    %v2064 = vsel %vm2063, %v2062, 0.0
    %2065 = vadd.xlane.f32.xlu0 %v2064
    %v2066 = vpop.xlane.xlu0 %2065
    %v2067 = vld [vmem:[#allocation3] sm:$0x1]
    %v2068 = vadd.f32 %v2066, %v2067
    %vm2069 = vcmask 0
    %2070 = vst.msk [vmem:[#allocation6] sm:$0x1] %vm2069, %v2068
    // Predicated region
    $region34: #{lstm_classifier_forward.1} parent=1 // pred_check
      _
    $region35: #{lstm_classifier_forward.1} parent=1 // pred_check_branch
      %2072 = sbr.rel (0) target = $region37
    $region36: #{lstm_classifier_forward.1} parent=1 // pred_region
      _
    $region37: #{lstm_classifier_forward.1} parent=1 // pred_fallthru
      _
    // Predicated region
    $region38: #{lstm_classifier_forward.1} parent=1 // pred_check
      _
    $region39: #{lstm_classifier_forward.1} parent=1 // pred_check_branch
      %2074 = sbr.rel (0) target = $region41
    $region40: #{lstm_classifier_forward.1} parent=1 // pred_region
      %s2076 = ssub.s32 128, 128
      %2077 = vsyncadd [#allocation5], %s2076
      %s2079 = sshll.u32 [#allocation4], 4
      %s2080 = int_to_ptr.vmem [resolvable:$true] %s2079
      %2082 = dma.vmem_to_hbm [thread:$0]  %s2080, 128, %s9, [#allocation5]
    $region41: #{lstm_classifier_forward.1} parent=1 // pred_fallthru
      _
    // Predicated region
    $region42: #{lstm_classifier_forward.1} parent=1 // pred_check
      _
    $region43: #{lstm_classifier_forward.1} parent=1 // pred_check_branch
      %2084 = sbr.rel (0) target = $region45
    $region44: #{lstm_classifier_forward.1} parent=1 // pred_region
      _
    $region45: #{lstm_classifier_forward.1} parent=1 // pred_fallthru
      _
    // Predicated region
    $region46: #{lstm_classifier_forward.1} parent=1 // pred_check
      _
    $region47: #{lstm_classifier_forward.1} parent=1 // pred_check_branch
      %2086 = sbr.rel (0) target = $region49
    $region48: #{lstm_classifier_forward.1} parent=1 // pred_region
      _
    $region49: #{lstm_classifier_forward.1} parent=1 // pred_fallthru
      _
    // Predicated region
    $region50: #{lstm_classifier_forward.1} parent=1 // pred_check
      _
    $region51: #{lstm_classifier_forward.1} parent=1 // pred_check_branch
      %2088 = sbr.rel (0) target = $region53
    $region52: #{lstm_classifier_forward.1} parent=1 // pred_region
      _
    $region53: #{lstm_classifier_forward.1} parent=1 // pred_fallthru
      _
    // Predicated region
    $region54: #{lstm_classifier_forward.1} parent=1 // pred_check
      _
    $region55: #{lstm_classifier_forward.1} parent=1 // pred_check_branch
      %2090 = sbr.rel (0) target = $region57
    $region56: #{lstm_classifier_forward.1} parent=1 // pred_region
      %s2092 = ssub.s32 16, 16
      %2093 = vsyncadd [#allocation7], %s2092
      %s2095 = sshll.u32 [#allocation6], 4
      %s2096 = int_to_ptr.vmem [resolvable:$true] %s2095
      %2098 = dma.vmem_to_hbm [thread:$0]  %s2096, 16, %s13, [#allocation7]
    $region57: #{lstm_classifier_forward.1} parent=1 // pred_fallthru
      _
    // Predicated region
    $region58: #{lstm_classifier_forward.1} parent=1 // pred_check
      _
    $region59: #{lstm_classifier_forward.1} parent=1 // pred_check_branch
      %2100 = sbr.rel (0) target = $region61
    $region60: #{lstm_classifier_forward.1} parent=1 // pred_region
      _
    $region61: #{lstm_classifier_forward.1} parent=1 // pred_fallthru
      _
    // Predicated region
    $region62: #{lstm_classifier_forward.1} parent=1 // pred_check
      _
    $region63: #{lstm_classifier_forward.1} parent=1 // pred_check_branch
      %2102 = sbr.rel (0) target = $region65
    $region64: #{lstm_classifier_forward.1} parent=1 // pred_region
      %2103 = dma.done [#allocation5], 128
    $region65: #{lstm_classifier_forward.1} parent=1 // pred_fallthru
      _
    // Predicated region
    $region66: #{lstm_classifier_forward.1} parent=1 // pred_check
      _
    $region67: #{lstm_classifier_forward.1} parent=1 // pred_check_branch
      %2105 = sbr.rel (0) target = $region69
    $region68: #{lstm_classifier_forward.1} parent=1 // pred_region
      _
    $region69: #{lstm_classifier_forward.1} parent=1 // pred_fallthru
      _
    // Predicated region
    $region70: #{lstm_classifier_forward.1} parent=1 // pred_check
      _
    $region71: #{lstm_classifier_forward.1} parent=1 // pred_check_branch
      %2107 = sbr.rel (0) target = $region73
    $region72: #{lstm_classifier_forward.1} parent=1 // pred_region
      _
    $region73: #{lstm_classifier_forward.1} parent=1 // pred_fallthru
      _
    // Predicated region
    $region74: #{lstm_classifier_forward.1} parent=1 // pred_check
      _
    $region75: #{lstm_classifier_forward.1} parent=1 // pred_check_branch
      %2109 = sbr.rel (0) target = $region77
    $region76: #{lstm_classifier_forward.1} parent=1 // pred_region
      _
    $region77: #{lstm_classifier_forward.1} parent=1 // pred_fallthru
      _
    // Predicated region
    $region78: #{lstm_classifier_forward.1} parent=1 // pred_check
      _
    $region79: #{lstm_classifier_forward.1} parent=1 // pred_check_branch
      %2111 = sbr.rel (0) target = $region81
    $region80: #{lstm_classifier_forward.1} parent=1 // pred_region
      %2112 = dma.done [#allocation7], 16
    $region81: #{lstm_classifier_forward.1} parent=1 // pred_fallthru
      _
    %2113 = vsyncpa [#allocation5], 1
    %2114 = vsyncpa [#allocation7], 1

</llo_original>
